<compile_context>
chip_gen: v7x
topology: tpu7x:2x2x1
jax: 0.10.0
libtpu: 0.0.40
codegen_flags: <defaults>
</compile_context>

<pallas_src>
import functools

import jax
import jax.numpy as jnp
from jax.experimental import pallas as pl
from jax.experimental.pallas import tpu as pltpu


# ----------------------------------------------------------------------------
# VMEM budget / tile-size derivation
# ----------------------------------------------------------------------------
def _vmem_budget_bytes():
    """~75% of physical VMEM: ~48 MiB on v7x (64 MiB), ~96 MiB on v5e/v6e (128 MiB)."""
    cap = 64 * 1024 * 1024  # conservative fallback (safe on all generations)
    try:
        info = pltpu.get_tpu_info()
        cap = int(getattr(info, "vmem_capacity_bytes", cap)) or cap
    except Exception:
        pass
    return int(cap * 3 // 4)


def _pick_tile_rows(H, W, Cin, Cout, k, out_itemsize, budget, max_tile_rows):
    """Largest tH dividing H whose double-buffered working set fits the budget."""
    pad = k // 2
    Wp = W + 2 * pad
    K = k * k * Cin
    for tH in range(min(H, max_tile_rows), 0, -1):
        if H % tH:
            continue
        rows_flat = (tH + 2 * pad) * Wp + (k - 1)
        tcols = tH * Wp
        in_blk = Cin * rows_flat * 2                 # bf16 input tile
        out_blk = Cout * tH * W * out_itemsize       # output tile
        col = K * tcols * 2                          # stacked-tap scratch (bf16)
        acc = Cout * tcols * 4                       # f32 matmul result
        wts = Cout * K * 2 + Cout * 4
        need = 2 * in_blk + 2 * out_blk + col + acc + wts
        if need <= budget:
            return tH
    return 1


def _pick_tile_cols(S, Cin, Cout, out_itemsize, budget, max_tile_cols):
    """Largest lane-dense spatial tile (multiple of 128, or full S) for 1x1 convs."""
    for t in range(min(S, max_tile_cols), 0, -1):
        if S % t:
            continue
        if t != S and t % 128 != 0:
            continue
        need = (2 * Cin * t * 2 + 2 * Cout * t * out_itemsize
                + Cout * t * 4 + Cout * Cin * 2 + Cout * 4)
        if need <= budget:
            return t
    return S


# ----------------------------------------------------------------------------
# Kernels
# ----------------------------------------------------------------------------
def _conv1x1_kernel(x_ref, w_ref, b_ref, o_ref, *, apply_leaky, neg_slope):
    # x_ref: (1, Cin, tS) bf16 ; w_ref: (Cout, Cin) bf16 ; b_ref: (Cout, 1) f32
    # o_ref: (1, Cout, tS) out_dtype  (lane-dense spatial tile)
    acc = jnp.dot(w_ref[...], x_ref[0], preferred_element_type=jnp.float32)
    acc = acc + b_ref[...]
    if apply_leaky:
        acc = jnp.where(acc >= 0, acc, neg_slope * acc)
    o_ref[0] = acc.astype(o_ref.dtype)


def _convkxk_kernel(x_ref, w_ref, b_ref, o_ref, col_ref, *,
                    k, tH, Wp, W_out, apply_leaky, neg_slope):
    # x_ref:   (1, 1, Cin, rows_flat) bf16  -- padded rows of this H-tile (with
    #          (k-1)-row halo), row-major flattened, plus (k-1) tail elements so
    #          every tap window is in bounds (the tail only feeds junk columns).
    # w_ref:   (Cout, k*k*Cin) bf16, tap-major then cin (matches col stacking).
    # b_ref:   (Cout, 1) f32
    # o_ref:   (1, Cout, 1, tH, W_out) out_dtype
    # col_ref: (k*k*Cin, tH*Wp) bf16 VMEM scratch -- stacked shifted taps so the
    #          whole conv is ONE matmul with K = k*k*Cin.
    cin = x_ref.shape[2]
    tcols = tH * Wp

    # Stack the k*k shifted slabs.  NOTE: these window reads are lane-offset
    # slices; at production sizes with 128-aligned Wp one would use pltpu.roll
    # (XLU) per tap instead to avoid the relayouts.
    for ky in range(k):
        for kx in range(k):
            tap = ky * k + kx
            off = ky * Wp + kx
            col_ref[tap * cin:(tap + 1) * cin, :] = x_ref[0, 0, :, pl.ds(off, tcols)]

    # Single folded matmul, f32 accumulation, bias + leaky_relu epilogue.
    acc = jnp.dot(w_ref[...], col_ref[...], preferred_element_type=jnp.float32)
    acc = acc + b_ref[...]
    if apply_leaky:
        acc = jnp.where(acc >= 0, acc, neg_slope * acc)
    acc = acc.astype(o_ref.dtype)

    # Store only the W_out valid columns of each row: the (k-1) junk columns per
    # row never reach HBM, so the wrapper needs no output slice copy.
    for r in range(tH):
        o_ref[0, :, 0, r, :] = acc[:, r * Wp:r * Wp + W_out]


# ----------------------------------------------------------------------------
# Parameter packing (hoisted out of the per-call path)
# ----------------------------------------------------------------------------
def pack_conv_params(weight_oihw, bias):
    Cout, Cin, kH, kW = weight_oihw.shape
    assert kH == kW, "square kernels only"
    assert kH % 2 == 1, "even kernel sizes not supported (pad = k//2 assumes odd k)"
    # (Cout, Cin, kH, kW) -> (Cout, kH, kW, Cin) -> (Cout, kH*kW*Cin), bf16.
    w2d = (jnp.transpose(weight_oihw, (0, 2, 3, 1))
           .reshape(Cout, kH * kW * Cin).astype(jnp.bfloat16))
    b = bias.astype(jnp.float32).reshape(Cout, 1)
    return w2d, b


# ----------------------------------------------------------------------------
# ConvLayer.forward: ReflectionPad2d(k//2) -> Conv2d(stride=1) -> leaky_relu
# NCHW in / NCHW out.  Non-last layers emit bf16; the last layer emits f32.
# ----------------------------------------------------------------------------
def conv_layer_forward(x_nchw, w2d, bias_col, *, kernel_size, stride=1,
                       is_last=False, neg_slope=0.01, out_dtype=None,
                       max_tile_rows=64, max_tile_cols=1 << 30):
    if stride != 1:
        # TODO(synk): FusionNet only uses stride=1.
        raise NotImplementedError("stride != 1 not needed by FusionNet")
    k = kernel_size
    assert k % 2 == 1, "even kernel sizes not supported"

    N, Cin, H, W = x_nchw.shape
    Cout, K = w2d.shape
    assert K == k * k * Cin, "packed weight does not match input channels / k"
    pad = k // 2
    if pad > 0:
        assert H > pad and W > pad, "reflection padding requires H, W > pad"

    if out_dtype is None:
        out_dtype = jnp.float32 if is_last else jnp.bfloat16
    out_isz = jnp.dtype(out_dtype).itemsize
    budget = _vmem_budget_bytes()

    x = x_nchw.astype(jnp.bfloat16)
    apply_leaky = not is_last

    if k == 1:
        # ---- pointwise conv: channel matmul over lane-dense flattened spatial ----
        S = H * W
        tS = _pick_tile_cols(S, Cin, Cout, out_isz, budget, max_tile_cols)
        n_tiles = S // tS
        x_flat = x.reshape(N, Cin, S)
        kernel = functools.partial(_conv1x1_kernel,
                                   apply_leaky=apply_leaky, neg_slope=neg_slope)
        cost = pl.CostEstimate(
            flops=int(2 * N * Cout * Cin * S), transcendentals=0,
            bytes_accessed=int(N * Cin * S * 2 + N * Cout * S * out_isz
                               + Cout * Cin * 2 + Cout * 4))
        out = pl.pallas_call(
            kernel,
            out_shape=jax.ShapeDtypeStruct((N, Cout, S), out_dtype),
            grid_spec=pltpu.PrefetchScalarGridSpec(
                num_scalar_prefetch=0,
                grid=(N, n_tiles),
                in_specs=[
                    pl.BlockSpec((1, Cin, tS), lambda n, j: (n, 0, j)),
                    pl.BlockSpec((Cout, Cin), lambda n, j: (0, 0)),   # resident
                    pl.BlockSpec((Cout, 1), lambda n, j: (0, 0)),     # resident
                ],
                out_specs=pl.BlockSpec((1, Cout, tS), lambda n, j: (n, 0, j)),
            ),
            compiler_params=pltpu.CompilerParams(
                dimension_semantics=("parallel", "parallel"),
                vmem_limit_bytes=budget),
            cost_estimate=cost,
        )(x_flat, w2d, bias_col)
        return out.reshape(N, Cout, H, W)   # free contiguous reshape

    # ---- k x k conv: H-tiled grid with (k-1)-row halo, one folded matmul/tile ----
    Wp = W + 2 * pad
    W_out = W            # stride 1, odd k
    tH = _pick_tile_rows(H, W, Cin, Cout, k, out_isz, budget, max_tile_rows)
    assert H % tH == 0
    n_tiles = H // tH
    rows_in = tH + 2 * pad
    rows_flat = rows_in * Wp + (k - 1)
    tcols = tH * Wp

    # Reflection pad + per-tile halo gather, fused into one XLA data-movement
    # pass (bf16).  TODO(synk): move into the kernel via pl.ANY + manual DMA.
    x_pad = jnp.pad(x, ((0, 0), (0, 0), (pad, pad), (pad, pad)), mode="reflect")
    row_idx = jnp.arange(n_tiles)[:, None] * tH + jnp.arange(rows_in)[None, :]
    xt = x_pad[:, :, row_idx, :]                              # (N, Cin, T, rows_in, Wp)
    xt = jnp.transpose(xt, (0, 2, 1, 3, 4)).reshape(N, n_tiles, Cin, rows_in * Wp)
    xt = jnp.pad(xt, ((0, 0), (0, 0), (0, 0), (0, k - 1)))    # tail keeps taps in bounds

    kernel = functools.partial(_convkxk_kernel, k=k, tH=tH, Wp=Wp, W_out=W_out,
                               apply_leaky=apply_leaky, neg_slope=neg_slope)
    cost = pl.CostEstimate(
        flops=int(2 * N * Cout * K * H * W_out), transcendentals=0,
        bytes_accessed=int(N * n_tiles * Cin * rows_flat * 2
                           + N * Cout * H * W_out * out_isz
                           + Cout * K * 2 + Cout * 4))
    out = pl.pallas_call(
        kernel,
        out_shape=jax.ShapeDtypeStruct((N, Cout, n_tiles, tH, W_out), out_dtype),
        grid_spec=pltpu.PrefetchScalarGridSpec(
            num_scalar_prefetch=0,
            grid=(N, n_tiles),
            in_specs=[
                pl.BlockSpec((1, 1, Cin, rows_flat), lambda n, j: (n, j, 0, 0)),
                pl.BlockSpec((Cout, K), lambda n, j: (0, 0)),   # resident weights
                pl.BlockSpec((Cout, 1), lambda n, j: (0, 0)),   # resident bias
            ],
            out_specs=pl.BlockSpec((1, Cout, 1, tH, W_out),
                                   lambda n, j: (n, 0, j, 0, 0)),
            scratch_shapes=[pltpu.VMEM((K, tcols), jnp.bfloat16)],
        ),
        compiler_params=pltpu.CompilerParams(
            dimension_semantics=("parallel", "parallel"),
            vmem_limit_bytes=budget),
        cost_estimate=cost,
    )(xt, w2d, bias_col)
    return out.reshape(N, Cout, H, W)       # free contiguous reshape, no junk cols


# ----------------------------------------------------------------------------
# Main
# ----------------------------------------------------------------------------
if __name__ == "__main__":
    key = jax.random.PRNGKey(0)
    k_x, k_w1, k_b1, k_w2, k_b2 = jax.random.split(key, 5)

    # Small shapes consistent with FusionNet's ConvLayers (e.g. conv_out_3/4 style).
    N, Cin, H, W = 2, 4, 16, 16
    C1, C2 = 8, 1

    x = jax.random.normal(k_x, (N, Cin, H, W), dtype=jnp.float32)

    def init_conv(kw_key, kb_key, cin, cout, ks):
        fan_in = cin * ks * ks
        bound = 1.0 / (fan_in ** 0.5)
        w_ = jax.random.uniform(kw_key, (cout, cin, ks, ks),
                                minval=-bound, maxval=bound, dtype=jnp.float32)
        b_ = jax.random.uniform(kb_key, (cout,),
                                minval=-bound, maxval=bound, dtype=jnp.float32)
        return w_, b_

    w1, b1 = init_conv(k_w1, k_b1, Cin, C1, 3)   # ConvLayer(4, 8, 3, 1)
    w2, b2 = init_conv(k_w2, k_b2, C1, C2, 1)    # ConvLayer(8, 1, 1, 1, is_last=True)

    # Hoisted parameter repack (once per layer).
    w1p, b1p = pack_conv_params(w1, b1)
    w2p, b2p = pack_conv_params(w2, b2)

    @jax.jit
    def fwd(xx):
        # Tile caps chosen small here so the H-tiled halo path and the spatial
        # 1x1 tiling are actually exercised (2 tiles each) at toy sizes.
        y_mid = conv_layer_forward(xx, w1p, b1p, kernel_size=3, is_last=False,
                                   max_tile_rows=8)
        y_out = conv_layer_forward(y_mid, w2p, b2p, kernel_size=1, is_last=True,
                                   max_tile_cols=128)
        return y_mid, y_out

    y1, y2 = jax.block_until_ready(fwd(x))

    # Reference with the same bf16-quantized conv inputs (f32 accumulation).
    def ref_conv_layer(xx, ww, bb, is_last):
        ks = ww.shape[-1]
        p = ks // 2
        xq = xx.astype(jnp.bfloat16).astype(jnp.float32)
        wq = ww.astype(jnp.bfloat16).astype(jnp.float32)
        if p > 0:
            xq = jnp.pad(xq, ((0, 0), (0, 0), (p, p), (p, p)), mode="reflect")
        r = jax.lax.conv_general_dilated(
            xq, wq, window_strides=(1, 1), padding="VALID",
            dimension_numbers=("NCHW", "OIHW", "NCHW"),
            preferred_element_type=jnp.float32)
        r = r + bb.reshape(1, -1, 1, 1)
        if not is_last:
            r = jnp.where(r >= 0, r, 0.01 * r)
        return r

    r1 = ref_conv_layer(x, w1, b1, False)
    r2 = ref_conv_layer(y1, w2, b2, True)    # feed kernel's y1: per-layer check

    assert y1.shape == (N, C1, H, W) and y1.dtype == jnp.bfloat16
    assert y2.shape == (N, C2, H, W) and y2.dtype == jnp.float32
    assert jnp.allclose(y1.astype(jnp.float32), r1, atol=3e-2, rtol=3e-2), \
        "layer-1 (3x3) mismatch"
    assert jnp.allclose(y2, r2, atol=2e-3, rtol=2e-3), "layer-2 (1x1) mismatch"

    print("KERNEL_OK")
</pallas_src>

<mosaic_0001>
module attributes {stable_mosaic.version = 11 : i64} {
  func.func @_convkxk_kernel(%arg0: i32, %arg1: i32, %arg2: memref<1x1x4x182xbf16, #tpu.memory_space<vmem>>, %arg3: memref<8x36xbf16, #tpu.memory_space<vmem>>, %arg4: memref<8x1xf32, #tpu.memory_space<vmem>>, %arg5: memref<1x8x1x8x16xbf16, #tpu.memory_space<vmem>>, %arg6: memref<36x144xbf16, #tpu.memory_space<vmem>>) attributes {dimension_semantics = [#tpu.dimension_semantics<parallel>, #tpu.dimension_semantics<parallel>], iteration_bounds = array<i64: 2, 2>, scalar_prefetch = 0 : i64, scratch_operands = 1 : i64, tpu.core_type = #tpu.core_type<tc>, window_params = [{transform_indices = @transform_0, window_bounds = array<i64: 1, 1, 4, 182>}, {pipeline_mode = #tpu.pipeline_mode<synchronous>, transform_indices = @transform_1, window_bounds = array<i64: 8, 36>}, {pipeline_mode = #tpu.pipeline_mode<synchronous>, transform_indices = @transform_2, window_bounds = array<i64: 8, 1>}, {transform_indices = @transform_3, window_bounds = array<i64: 1, 8, 1, 8, 16>}]} {
    %c0 = arith.constant 0 : index
    %c0_0 = arith.constant 0 : index
    %c0_1 = arith.constant 0 : index
    %c0_2 = arith.constant 0 : index
    %0 = vector.load %arg2[%c0, %c0_0, %c0_1, %c0_2] : memref<1x1x4x182xbf16, #tpu.memory_space<vmem>>, vector<1x1x4x144xbf16>
    %1 = vector.shape_cast %0 : vector<1x1x4x144xbf16> to vector<4x144xbf16>
    %c0_3 = arith.constant 0 : index
    %c0_4 = arith.constant 0 : index
    %2 = vector.load %arg6[%c0_3, %c0_4] : memref<36x144xbf16, #tpu.memory_space<vmem>>, vector<4x144xbf16>
    tpu.vector_store %arg6[%c0_3, %c0_4], %1 {strides = array<i32>} : memref<36x144xbf16, #tpu.memory_space<vmem>>, vector<4x144xbf16>,
    %c0_5 = arith.constant 0 : index
    %c0_6 = arith.constant 0 : index
    %c0_7 = arith.constant 0 : index
    %c1 = arith.constant 1 : index
    %3 = vector.load %arg2[%c0_5, %c0_6, %c0_7, %c1] : memref<1x1x4x182xbf16, #tpu.memory_space<vmem>>, vector<1x1x4x144xbf16>
    %4 = vector.shape_cast %3 : vector<1x1x4x144xbf16> to vector<4x144xbf16>
    %c4 = arith.constant 4 : index
    %c0_8 = arith.constant 0 : index
    %5 = vector.load %arg6[%c4, %c0_8] : memref<36x144xbf16, #tpu.memory_space<vmem>>, vector<4x144xbf16>
    tpu.vector_store %arg6[%c4, %c0_8], %4 {strides = array<i32>} : memref<36x144xbf16, #tpu.memory_space<vmem>>, vector<4x144xbf16>,
    %c0_9 = arith.constant 0 : index
    %c0_10 = arith.constant 0 : index
    %c0_11 = arith.constant 0 : index
    %c2 = arith.constant 2 : index
    %6 = vector.load %arg2[%c0_9, %c0_10, %c0_11, %c2] : memref<1x1x4x182xbf16, #tpu.memory_space<vmem>>, vector<1x1x4x144xbf16>
    %7 = vector.shape_cast %6 : vector<1x1x4x144xbf16> to vector<4x144xbf16>
    %c8 = arith.constant 8 : index
    %c0_12 = arith.constant 0 : index
    %8 = vector.load %arg6[%c8, %c0_12] : memref<36x144xbf16, #tpu.memory_space<vmem>>, vector<4x144xbf16>
    tpu.vector_store %arg6[%c8, %c0_12], %7 {strides = array<i32>} : memref<36x144xbf16, #tpu.memory_space<vmem>>, vector<4x144xbf16>,
    %c0_13 = arith.constant 0 : index
    %c0_14 = arith.constant 0 : index
    %c0_15 = arith.constant 0 : index
    %c18 = arith.constant 18 : index
    %9 = vector.load %arg2[%c0_13, %c0_14, %c0_15, %c18] : memref<1x1x4x182xbf16, #tpu.memory_space<vmem>>, vector<1x1x4x144xbf16>
    %10 = vector.shape_cast %9 : vector<1x1x4x144xbf16> to vector<4x144xbf16>
    %c12 = arith.constant 12 : index
    %c0_16 = arith.constant 0 : index
    %11 = vector.load %arg6[%c12, %c0_16] : memref<36x144xbf16, #tpu.memory_space<vmem>>, vector<4x144xbf16>
    tpu.vector_store %arg6[%c12, %c0_16], %10 {strides = array<i32>} : memref<36x144xbf16, #tpu.memory_space<vmem>>, vector<4x144xbf16>,
    %c0_17 = arith.constant 0 : index
    %c0_18 = arith.constant 0 : index
    %c0_19 = arith.constant 0 : index
    %c19 = arith.constant 19 : index
    %12 = vector.load %arg2[%c0_17, %c0_18, %c0_19, %c19] : memref<1x1x4x182xbf16, #tpu.memory_space<vmem>>, vector<1x1x4x144xbf16>
    %13 = vector.shape_cast %12 : vector<1x1x4x144xbf16> to vector<4x144xbf16>
    %c16 = arith.constant 16 : index
    %c0_20 = arith.constant 0 : index
    %14 = vector.load %arg6[%c16, %c0_20] : memref<36x144xbf16, #tpu.memory_space<vmem>>, vector<4x144xbf16>
    tpu.vector_store %arg6[%c16, %c0_20], %13 {strides = array<i32>} : memref<36x144xbf16, #tpu.memory_space<vmem>>, vector<4x144xbf16>,
    %c0_21 = arith.constant 0 : index
    %c0_22 = arith.constant 0 : index
    %c0_23 = arith.constant 0 : index
    %c20 = arith.constant 20 : index
    %15 = vector.load %arg2[%c0_21, %c0_22, %c0_23, %c20] : memref<1x1x4x182xbf16, #tpu.memory_space<vmem>>, vector<1x1x4x144xbf16>
    %16 = vector.shape_cast %15 : vector<1x1x4x144xbf16> to vector<4x144xbf16>
    %c20_24 = arith.constant 20 : index
    %c0_25 = arith.constant 0 : index
    %17 = vector.load %arg6[%c20_24, %c0_25] : memref<36x144xbf16, #tpu.memory_space<vmem>>, vector<4x144xbf16>
    tpu.vector_store %arg6[%c20_24, %c0_25], %16 {strides = array<i32>} : memref<36x144xbf16, #tpu.memory_space<vmem>>, vector<4x144xbf16>,
    %c0_26 = arith.constant 0 : index
    %c0_27 = arith.constant 0 : index
    %c0_28 = arith.constant 0 : index
    %c36 = arith.constant 36 : index
    %18 = vector.load %arg2[%c0_26, %c0_27, %c0_28, %c36] : memref<1x1x4x182xbf16, #tpu.memory_space<vmem>>, vector<1x1x4x144xbf16>
    %19 = vector.shape_cast %18 : vector<1x1x4x144xbf16> to vector<4x144xbf16>
    %c24 = arith.constant 24 : index
    %c0_29 = arith.constant 0 : index
    %20 = vector.load %arg6[%c24, %c0_29] : memref<36x144xbf16, #tpu.memory_space<vmem>>, vector<4x144xbf16>
    tpu.vector_store %arg6[%c24, %c0_29], %19 {strides = array<i32>} : memref<36x144xbf16, #tpu.memory_space<vmem>>, vector<4x144xbf16>,
    %c0_30 = arith.constant 0 : index
    %c0_31 = arith.constant 0 : index
    %c0_32 = arith.constant 0 : index
    %c37 = arith.constant 37 : index
    %21 = vector.load %arg2[%c0_30, %c0_31, %c0_32, %c37] : memref<1x1x4x182xbf16, #tpu.memory_space<vmem>>, vector<1x1x4x144xbf16>
    %22 = vector.shape_cast %21 : vector<1x1x4x144xbf16> to vector<4x144xbf16>
    %c28 = arith.constant 28 : index
    %c0_33 = arith.constant 0 : index
    %23 = vector.load %arg6[%c28, %c0_33] : memref<36x144xbf16, #tpu.memory_space<vmem>>, vector<4x144xbf16>
    tpu.vector_store %arg6[%c28, %c0_33], %22 {strides = array<i32>} : memref<36x144xbf16, #tpu.memory_space<vmem>>, vector<4x144xbf16>,
    %c0_34 = arith.constant 0 : index
    %c0_35 = arith.constant 0 : index
    %c0_36 = arith.constant 0 : index
    %c38 = arith.constant 38 : index
    %24 = vector.load %arg2[%c0_34, %c0_35, %c0_36, %c38] : memref<1x1x4x182xbf16, #tpu.memory_space<vmem>>, vector<1x1x4x144xbf16>
    %25 = vector.shape_cast %24 : vector<1x1x4x144xbf16> to vector<4x144xbf16>
    %c32 = arith.constant 32 : index
    %c0_37 = arith.constant 0 : index
    %26 = vector.load %arg6[%c32, %c0_37] : memref<36x144xbf16, #tpu.memory_space<vmem>>, vector<4x144xbf16>
    tpu.vector_store %arg6[%c32, %c0_37], %25 {strides = array<i32>} : memref<36x144xbf16, #tpu.memory_space<vmem>>, vector<4x144xbf16>,
    %c0_38 = arith.constant 0 : index
    %c0_39 = arith.constant 0 : index
    %27 = vector.load %arg3[%c0_38, %c0_39] : memref<8x36xbf16, #tpu.memory_space<vmem>>, vector<8x36xbf16>
    %c0_40 = arith.constant 0 : index
    %c0_41 = arith.constant 0 : index
    %28 = vector.load %arg6[%c0_40, %c0_41] : memref<36x144xbf16, #tpu.memory_space<vmem>>, vector<36x144xbf16>
    %cst = arith.constant dense<0.000000e+00> : vector<8x144xf32>
    %29 = tpu.matmul %27, %28, %cst {dimension_numbers = #tpu.dot_dimension_numbers<[1], [0], [0], [1], [0, 0, 1, 1], [], []>} : vector<8x36xbf16>, vector<36x144xbf16>, vector<8x144xf32> -> vector<8x144xf32>
    %c0_42 = arith.constant 0 : index
    %c0_43 = arith.constant 0 : index
    %30 = vector.load %arg4[%c0_42, %c0_43] : memref<8x1xf32, #tpu.memory_space<vmem>>, vector<8x1xf32>
    %31 = vector.broadcast %30 : vector<8x1xf32> to vector<8x144xf32>
    %32 = arith.addf %29, %31 : vector<8x144xf32>
    %cst_44 = arith.constant 0.000000e+00 : f32
    %33 = vector.broadcast %cst_44 : f32 to vector<8x144xf32>
    %34 = arith.cmpf oge, %32, %33 : vector<8x144xf32>
    %cst_45 = arith.constant 0.00999999977 : f32
    %35 = vector.broadcast %cst_45 : f32 to vector<8x144xf32>
    %36 = arith.mulf %35, %32 : vector<8x144xf32>
    %37 = arith.select %34, %32, %36 : vector<8x144xi1>, vector<8x144xf32>
    %38 = arith.truncf %37 : vector<8x144xf32> to vector<8x144xbf16>
    %39 = vector.extract_strided_slice %38 {offsets = [0, 0], sizes = [8, 16], strides = [1, 1]} : vector<8x144xbf16> to vector<8x16xbf16>
    %c0_46 = arith.constant 0 : index
    %c0_47 = arith.constant 0 : index
    %c0_48 = arith.constant 0 : index
    %c0_49 = arith.constant 0 : index
    %c0_50 = arith.constant 0 : index
    %40 = vector.load %arg5[%c0_46, %c0_47, %c0_48, %c0_49, %c0_50] : memref<1x8x1x8x16xbf16, #tpu.memory_space<vmem>>, vector<1x8x1x1x16xbf16>
    %41 = vector.shape_cast %40 : vector<1x8x1x1x16xbf16> to vector<8x16xbf16>
    %42 = vector.shape_cast %39 : vector<8x16xbf16> to vector<1x8x1x1x16xbf16>
    tpu.vector_store %arg5[%c0_46, %c0_47, %c0_48, %c0_49, %c0_50], %42 {strides = array<i32>} : memref<1x8x1x8x16xbf16, #tpu.memory_space<vmem>>, vector<1x8x1x1x16xbf16>,
    %43 = vector.extract_strided_slice %38 {offsets = [0, 18], sizes = [8, 16], strides = [1, 1]} : vector<8x144xbf16> to vector<8x16xbf16>
    %c0_51 = arith.constant 0 : index
    %c0_52 = arith.constant 0 : index
    %c0_53 = arith.constant 0 : index
    %c1_54 = arith.constant 1 : index
    %c0_55 = arith.constant 0 : index
    %44 = vector.load %arg5[%c0_51, %c0_52, %c0_53, %c1_54, %c0_55] : memref<1x8x1x8x16xbf16, #tpu.memory_space<vmem>>, vector<1x8x1x1x16xbf16>
    %45 = vector.shape_cast %44 : vector<1x8x1x1x16xbf16> to vector<8x16xbf16>
    %46 = vector.shape_cast %43 : vector<8x16xbf16> to vector<1x8x1x1x16xbf16>
    tpu.vector_store %arg5[%c0_51, %c0_52, %c0_53, %c1_54, %c0_55], %46 {strides = array<i32>} : memref<1x8x1x8x16xbf16, #tpu.memory_space<vmem>>, vector<1x8x1x1x16xbf16>,
    %47 = vector.extract_strided_slice %38 {offsets = [0, 36], sizes = [8, 16], strides = [1, 1]} : vector<8x144xbf16> to vector<8x16xbf16>
    %c0_56 = arith.constant 0 : index
    %c0_57 = arith.constant 0 : index
    %c0_58 = arith.constant 0 : index
    %c2_59 = arith.constant 2 : index
    %c0_60 = arith.constant 0 : index
    %48 = vector.load %arg5[%c0_56, %c0_57, %c0_58, %c2_59, %c0_60] : memref<1x8x1x8x16xbf16, #tpu.memory_space<vmem>>, vector<1x8x1x1x16xbf16>
    %49 = vector.shape_cast %48 : vector<1x8x1x1x16xbf16> to vector<8x16xbf16>
    %50 = vector.shape_cast %47 : vector<8x16xbf16> to vector<1x8x1x1x16xbf16>
    tpu.vector_store %arg5[%c0_56, %c0_57, %c0_58, %c2_59, %c0_60], %50 {strides = array<i32>} : memref<1x8x1x8x16xbf16, #tpu.memory_space<vmem>>, vector<1x8x1x1x16xbf16>,
    %51 = vector.extract_strided_slice %38 {offsets = [0, 54], sizes = [8, 16], strides = [1, 1]} : vector<8x144xbf16> to vector<8x16xbf16>
    %c0_61 = arith.constant 0 : index
    %c0_62 = arith.constant 0 : index
    %c0_63 = arith.constant 0 : index
    %c3 = arith.constant 3 : index
    %c0_64 = arith.constant 0 : index
    %52 = vector.load %arg5[%c0_61, %c0_62, %c0_63, %c3, %c0_64] : memref<1x8x1x8x16xbf16, #tpu.memory_space<vmem>>, vector<1x8x1x1x16xbf16>
    %53 = vector.shape_cast %52 : vector<1x8x1x1x16xbf16> to vector<8x16xbf16>
    %54 = vector.shape_cast %51 : vector<8x16xbf16> to vector<1x8x1x1x16xbf16>
    tpu.vector_store %arg5[%c0_61, %c0_62, %c0_63, %c3, %c0_64], %54 {strides = array<i32>} : memref<1x8x1x8x16xbf16, #tpu.memory_space<vmem>>, vector<1x8x1x1x16xbf16>,
    %55 = vector.extract_strided_slice %38 {offsets = [0, 72], sizes = [8, 16], strides = [1, 1]} : vector<8x144xbf16> to vector<8x16xbf16>
    %c0_65 = arith.constant 0 : index
    %c0_66 = arith.constant 0 : index
    %c0_67 = arith.constant 0 : index
    %c4_68 = arith.constant 4 : index
    %c0_69 = arith.constant 0 : index
    %56 = vector.load %arg5[%c0_65, %c0_66, %c0_67, %c4_68, %c0_69] : memref<1x8x1x8x16xbf16, #tpu.memory_space<vmem>>, vector<1x8x1x1x16xbf16>
    %57 = vector.shape_cast %56 : vector<1x8x1x1x16xbf16> to vector<8x16xbf16>
    %58 = vector.shape_cast %55 : vector<8x16xbf16> to vector<1x8x1x1x16xbf16>
    tpu.vector_store %arg5[%c0_65, %c0_66, %c0_67, %c4_68, %c0_69], %58 {strides = array<i32>} : memref<1x8x1x8x16xbf16, #tpu.memory_space<vmem>>, vector<1x8x1x1x16xbf16>,
    %59 = vector.extract_strided_slice %38 {offsets = [0, 90], sizes = [8, 16], strides = [1, 1]} : vector<8x144xbf16> to vector<8x16xbf16>
    %c0_70 = arith.constant 0 : index
    %c0_71 = arith.constant 0 : index
    %c0_72 = arith.constant 0 : index
    %c5 = arith.constant 5 : index
    %c0_73 = arith.constant 0 : index
    %60 = vector.load %arg5[%c0_70, %c0_71, %c0_72, %c5, %c0_73] : memref<1x8x1x8x16xbf16, #tpu.memory_space<vmem>>, vector<1x8x1x1x16xbf16>
    %61 = vector.shape_cast %60 : vector<1x8x1x1x16xbf16> to vector<8x16xbf16>
    %62 = vector.shape_cast %59 : vector<8x16xbf16> to vector<1x8x1x1x16xbf16>
    tpu.vector_store %arg5[%c0_70, %c0_71, %c0_72, %c5, %c0_73], %62 {strides = array<i32>} : memref<1x8x1x8x16xbf16, #tpu.memory_space<vmem>>, vector<1x8x1x1x16xbf16>,
    %63 = vector.extract_strided_slice %38 {offsets = [0, 108], sizes = [8, 16], strides = [1, 1]} : vector<8x144xbf16> to vector<8x16xbf16>
    %c0_74 = arith.constant 0 : index
    %c0_75 = arith.constant 0 : index
    %c0_76 = arith.constant 0 : index
    %c6 = arith.constant 6 : index
    %c0_77 = arith.constant 0 : index
    %64 = vector.load %arg5[%c0_74, %c0_75, %c0_76, %c6, %c0_77] : memref<1x8x1x8x16xbf16, #tpu.memory_space<vmem>>, vector<1x8x1x1x16xbf16>
    %65 = vector.shape_cast %64 : vector<1x8x1x1x16xbf16> to vector<8x16xbf16>
    %66 = vector.shape_cast %63 : vector<8x16xbf16> to vector<1x8x1x1x16xbf16>
    tpu.vector_store %arg5[%c0_74, %c0_75, %c0_76, %c6, %c0_77], %66 {strides = array<i32>} : memref<1x8x1x8x16xbf16, #tpu.memory_space<vmem>>, vector<1x8x1x1x16xbf16>,
    %67 = vector.extract_strided_slice %38 {offsets = [0, 126], sizes = [8, 16], strides = [1, 1]} : vector<8x144xbf16> to vector<8x16xbf16>
    %c0_78 = arith.constant 0 : index
    %c0_79 = arith.constant 0 : index
    %c0_80 = arith.constant 0 : index
    %c7 = arith.constant 7 : index
    %c0_81 = arith.constant 0 : index
    %68 = vector.load %arg5[%c0_78, %c0_79, %c0_80, %c7, %c0_81] : memref<1x8x1x8x16xbf16, #tpu.memory_space<vmem>>, vector<1x8x1x1x16xbf16>
    %69 = vector.shape_cast %68 : vector<1x8x1x1x16xbf16> to vector<8x16xbf16>
    %70 = vector.shape_cast %67 : vector<8x16xbf16> to vector<1x8x1x1x16xbf16>
    tpu.vector_store %arg5[%c0_78, %c0_79, %c0_80, %c7, %c0_81], %70 {strides = array<i32>} : memref<1x8x1x8x16xbf16, #tpu.memory_space<vmem>>, vector<1x8x1x1x16xbf16>,
    return
  }
  func.func @transform_0(%arg0: i32, %arg1: i32) -> (i32, i32, i32, i32) {
    %c0_i32 = arith.constant 0 : i32
    %c0_i32_0 = arith.constant 0 : i32
    %c0_i32_1 = arith.constant 0 : i32
    return %arg0, %arg1, %c0_i32, %c0_i32_0 : i32, i32, i32, i32
  }
  func.func @transform_1(%arg0: i32, %arg1: i32) -> (i32, i32) {
    %c0_i32 = arith.constant 0 : i32
    %c0_i32_0 = arith.constant 0 : i32
    %c0_i32_1 = arith.constant 0 : i32
    return %c0_i32, %c0_i32_0 : i32, i32
  }
  func.func @transform_2(%arg0: i32, %arg1: i32) -> (i32, i32) {
    %c0_i32 = arith.constant 0 : i32
    %c0_i32_0 = arith.constant 0 : i32
    %c0_i32_1 = arith.constant 0 : i32
    return %c0_i32, %c0_i32_0 : i32, i32
  }
  func.func @transform_3(%arg0: i32, %arg1: i32) -> (i32, i32, i32, i32, i32) {
    %c0_i32 = arith.constant 0 : i32
    %c0_i32_0 = arith.constant 0 : i32
    %c0_i32_1 = arith.constant 0 : i32
    %c0_i32_2 = arith.constant 0 : i32
    return %arg0, %c0_i32, %arg1, %c0_i32_0, %c0_i32_1 : i32, i32, i32, i32, i32
  }
}

module attributes {stable_mosaic.version = 11 : i64} {
  func.func @_conv1x1_kernel(%arg0: i32, %arg1: i32, %arg2: memref<1x8x128xbf16, #tpu.memory_space<vmem>>, %arg3: memref<1x8xbf16, #tpu.memory_space<vmem>>, %arg4: memref<1x1xf32, #tpu.memory_space<vmem>>, %arg5: memref<1x1x128xf32, #tpu.memory_space<vmem>>) attributes {dimension_semantics = [#tpu.dimension_semantics<parallel>, #tpu.dimension_semantics<parallel>], iteration_bounds = array<i64: 2, 2>, scalar_prefetch = 0 : i64, scratch_operands = 0 : i64, tpu.core_type = #tpu.core_type<tc>, window_params = [{transform_indices = @transform_0, window_bounds = array<i64: 1, 8, 128>}, {pipeline_mode = #tpu.pipeline_mode<synchronous>, transform_indices = @transform_1, window_bounds = array<i64: 1, 8>}, {pipeline_mode = #tpu.pipeline_mode<synchronous>, transform_indices = @transform_2, window_bounds = array<i64: 1, 1>}, {transform_indices = @transform_3, window_bounds = array<i64: 1, 1, 128>}]} {
    %c0 = arith.constant 0 : index
    %c0_0 = arith.constant 0 : index
    %0 = vector.load %arg3[%c0, %c0_0] : memref<1x8xbf16, #tpu.memory_space<vmem>>, vector<1x8xbf16>
    %c0_1 = arith.constant 0 : index
    %c0_2 = arith.constant 0 : index
    %c0_3 = arith.constant 0 : index
    %1 = vector.load %arg2[%c0_1, %c0_2, %c0_3] : memref<1x8x128xbf16, #tpu.memory_space<vmem>>, vector<1x8x128xbf16>
    %2 = vector.shape_cast %1 : vector<1x8x128xbf16> to vector<8x128xbf16>
    %cst = arith.constant dense<0.000000e+00> : vector<1x128xf32>
    %3 = tpu.matmul %0, %2, %cst {dimension_numbers = #tpu.dot_dimension_numbers<[1], [0], [0], [1], [0, 0, 1, 1], [], []>} : vector<1x8xbf16>, vector<8x128xbf16>, vector<1x128xf32> -> vector<1x128xf32>
    %c0_4 = arith.constant 0 : index
    %c0_5 = arith.constant 0 : index
    %4 = vector.load %arg4[%c0_4, %c0_5] : memref<1x1xf32, #tpu.memory_space<vmem>>, vector<1x1xf32>
    %5 = vector.broadcast %4 : vector<1x1xf32> to vector<1x128xf32>
    %6 = arith.addf %3, %5 : vector<1x128xf32>
    %c0_6 = arith.constant 0 : index
    %c0_7 = arith.constant 0 : index
    %c0_8 = arith.constant 0 : index
    %7 = vector.load %arg5[%c0_6, %c0_7, %c0_8] : memref<1x1x128xf32, #tpu.memory_space<vmem>>, vector<1x1x128xf32>
    %8 = vector.shape_cast %7 : vector<1x1x128xf32> to vector<1x128xf32>
    %9 = vector.shape_cast %6 : vector<1x128xf32> to vector<1x1x128xf32>
    tpu.vector_store %arg5[%c0_6, %c0_7, %c0_8], %9 {strides = array<i32>} : memref<1x1x128xf32, #tpu.memory_space<vmem>>, vector<1x1x128xf32>,
    return
  }
  func.func @transform_0(%arg0: i32, %arg1: i32) -> (i32, i32, i32) {
    %c0_i32 = arith.constant 0 : i32
    %c0_i32_0 = arith.constant 0 : i32
    return %arg0, %c0_i32, %arg1 : i32, i32, i32
  }
  func.func @transform_1(%arg0: i32, %arg1: i32) -> (i32, i32) {
    %c0_i32 = arith.constant 0 : i32
    %c0_i32_0 = arith.constant 0 : i32
    %c0_i32_1 = arith.constant 0 : i32
    return %c0_i32, %c0_i32_0 : i32, i32
  }
  func.func @transform_2(%arg0: i32, %arg1: i32) -> (i32, i32) {
    %c0_i32 = arith.constant 0 : i32
    %c0_i32_0 = arith.constant 0 : i32
    %c0_i32_1 = arith.constant 0 : i32
    return %c0_i32, %c0_i32_0 : i32, i32
  }
  func.func @transform_3(%arg0: i32, %arg1: i32) -> (i32, i32, i32) {
    %c0_i32 = arith.constant 0 : i32
    %c0_i32_0 = arith.constant 0 : i32
    return %arg0, %c0_i32, %arg1 : i32, i32, i32
  }
}

</mosaic_0001>

<llo_original>
// kernel: fwd.3
$region0: #{fwd.3}
  #allocation0 [shape = 'u32[]', space=smem, size = 0x4, offset = 0x4, fixed_abs, tag = 'smem constant byte address 0x4 - core index']
  #allocation1 [shape = 'u32[144,128]{1,0:T(1,128)}', space=vmem, size = 0x12000, scoped, tag = 'internal scratch']
  #allocation2 [shape = 'f32[1,1]{1,0:T(1,128)S(1)}', space=vmem, size = 0x200, scoped, tag = 'scoped memory for fwd.3']
  %s0 = inlined_call_operand.vmem [shape: bf16[2,8,256], index: 0, kind: input, shape index: {}]
  %s1 = inlined_call_operand.vmem [shape: bf16[1,8], index: 1, kind: input, shape index: {}]
  %s2 = inlined_call_operand.<no memory space> [shape: f32[1,1], index: 2, kind: input, shape index: {}]
  %s3 = inlined_call_operand.vmem [shape: f32[2,1,256], index: 3, kind: output, shape index: {}]
  %s4 = sld [smem:[#allocation0]]
  $region45: #{fwd.3} parent=0
    _
  %s6 = ssub.s32 1, %s4
  %s7 = scalar_select 0, %s6, %s4
  %v8 = vstv %s2
  %9 = vst [vmem:[#allocation2] sm:$0x1] %v8
  loop: start=0, step=1, limit=6
  $region2: #{fwd.3} parent=0 // loop_pre_header
    _
  $region3: #{fwd.3} parent=0 // loop_header
    %s11 = sphi 0, %s15
    %p12 = scmp.ge.s32.totalorder %s11, 6
    %s18 = sphi 0, %s30
    %s19 = sphi 0, %s26
    %s20 = sphi 0, %s18
    %s21 = sphi 0, %s19
    %s22 = sphi 0, %s20
    %s23 = sphi 0, %s21
    %s35 = sphi 0, %s37
    %s38 = sphi 0, %s35
    %s39 = sphi 0, %s38
    %s55 = sphi 0, %s39
    %s59 = sphi 0, %s59
    %s61 = sphi 0, %s59
    %s62 = sphi 0, %s61
    %s76 = sphi 0, %s62
    %s80 = sphi 0, %s80
    %s82 = sphi 0, %s80
    %s83 = sphi 0, %s82
    %s97 = sphi 0, %s83
    %s105 = sphi 0, %s107
    %s108 = sphi 0, %s105
    %s109 = sphi 0, %s108
    %s125 = sphi 0, %s109
  $region4: #{fwd.3} parent=0 // loop_header_branch
    %14 = sbr.rel (%p12) target = $region8
  $region5: #{fwd.3} parent=0 // loop_body
    %s16 = ssub.s32 %s11, 1
    %s17 = ssub.s32 %s11, 2
    %s24 = sadd.s32 1, %s19
    %p25 = scmp.ge.s32.totalorder %s24, 2
    %s26 = scalar_select %p25, 0, %s24
    %s27 = sadd.s32 1, %s18
    %s28 = scalar_select %p25, %s27, %s18
    %p29 = scmp.ge.s32.totalorder %s28, 2
    %s30 = scalar_select %p29, 0, %s28
    %s31 = ssub.s32 %s18, %s30
    %s32 = ssub.s32 %s19, %s26
    %s33 = sor.u32 %s31, %s32
    %p34 = scmp.eq.s32.totalorder %s33, 0
    %s36 = sadd.s32 %s35, 1
    %s37 = scalar_select %p34, %s35, %s36
    %p40 = pneg %p34
    %p41 = scmp.eq.s32.totalorder %s11, 3
    %p42 = por %p40, %p41
    %p43 = scmp.ne.s32.totalorder %s35, %s38
    %p44 = scmp.eq.s32.totalorder %s11, 0
    %p45 = por %p43, %p44
    %p46 = scmp.ne.s32.totalorder %s35, %s38
    %p47 = scmp.eq.s32.totalorder %s16, 3
    %p48 = por %p46, %p47
    %p49 = scmp.ne.s32.totalorder %s38, %s39
    %p50 = scmp.eq.s32.totalorder %s16, 0
    %p51 = por %p49, %p50
    %p52 = scmp.ne.s32.totalorder %s38, %s39
    %p53 = scmp.eq.s32.totalorder %s17, 3
    %p54 = por %p52, %p53
    %p56 = scmp.ne.s32.totalorder %s39, %s55
    %p57 = scmp.eq.s32.totalorder %s17, 0
    %p58 = por %p56, %p57
    %s60 = sadd.s32 %s59, 1
    %p63 = scmp.eq.s32.totalorder %s11, 3
    %p64 = scmp.ne.s32.totalorder %s59, %s61
    %p65 = scmp.eq.s32.totalorder %s11, 0
    %p66 = por %p64, %p65
    %p67 = scmp.ne.s32.totalorder %s59, %s61
    %p68 = scmp.eq.s32.totalorder %s16, 3
    %p69 = por %p67, %p68
    %p70 = scmp.ne.s32.totalorder %s61, %s62
    %p71 = scmp.eq.s32.totalorder %s16, 0
    %p72 = por %p70, %p71
    %p73 = scmp.ne.s32.totalorder %s61, %s62
    %p74 = scmp.eq.s32.totalorder %s17, 3
    %p75 = por %p73, %p74
    %p77 = scmp.ne.s32.totalorder %s62, %s76
    %p78 = scmp.eq.s32.totalorder %s17, 0
    %p79 = por %p77, %p78
    %s81 = sadd.s32 %s80, 1
    %p84 = scmp.eq.s32.totalorder %s11, 3
    %p85 = scmp.ne.s32.totalorder %s80, %s82
    %p86 = scmp.eq.s32.totalorder %s11, 0
    %p87 = por %p85, %p86
    %p88 = scmp.ne.s32.totalorder %s80, %s82
    %p89 = scmp.eq.s32.totalorder %s16, 3
    %p90 = por %p88, %p89
    %p91 = scmp.ne.s32.totalorder %s82, %s83
    %p92 = scmp.eq.s32.totalorder %s16, 0
    %p93 = por %p91, %p92
    %p94 = scmp.ne.s32.totalorder %s82, %s83
    %p95 = scmp.eq.s32.totalorder %s17, 3
    %p96 = por %p94, %p95
    %p98 = scmp.ne.s32.totalorder %s83, %s97
    %p99 = scmp.eq.s32.totalorder %s17, 0
    %p100 = por %p98, %p99
    %s101 = ssub.s32 %s18, %s30
    %s102 = ssub.s32 %s19, %s26
    %s103 = sor.u32 %s101, %s102
    %p104 = scmp.eq.s32.totalorder %s103, 0
    %s106 = sadd.s32 %s105, 1
    %s107 = scalar_select %p104, %s105, %s106
    %p110 = pneg %p104
    %p111 = scmp.eq.s32.totalorder %s11, 3
    %p112 = por %p110, %p111
    %p113 = scmp.ne.s32.totalorder %s105, %s108
    %p114 = scmp.eq.s32.totalorder %s11, 0
    %p115 = por %p113, %p114
    %p116 = scmp.ne.s32.totalorder %s105, %s108
    %p117 = scmp.eq.s32.totalorder %s16, 3
    %p118 = por %p116, %p117
    %p119 = scmp.ne.s32.totalorder %s108, %s109
    %p120 = scmp.eq.s32.totalorder %s16, 0
    %p121 = por %p119, %p120
    %p122 = scmp.ne.s32.totalorder %s108, %s109
    %p123 = scmp.eq.s32.totalorder %s17, 3
    %p124 = por %p122, %p123
    %p126 = scmp.ne.s32.totalorder %s109, %s125
    %p127 = scmp.eq.s32.totalorder %s17, 0
    %p128 = por %p126, %p127
    %p129 = scmp.le.s32.totalorder 1, %s11
    %p130 = scmp.lt.s32.totalorder %s11, 5
    %p131 = pnand %p129, %p130
    %p132 = pneg %p131
    // Predicated region
    $region9: #{fwd.3} parent=5 // pred_check
      _
    $region10: #{fwd.3} parent=5 // pred_check_branch
      %134 = sbr.rel (%p131) target = $region12
    $region11: #{fwd.3} parent=5 // pred_region
      %s135 = ssub.s32 %s11, 1
      // Predicated region
      $region13: #{fwd.3} parent=11 // pred_check
        %p136 = pneg %p72
      $region14: #{fwd.3} parent=11 // pred_check_branch
        %138 = sbr.rel (%p136) target = $region16
      $region15: #{fwd.3} parent=11 // pred_region
        _
      $region16: #{fwd.3} parent=11 // pred_fallthru
        _
      // Predicated region
      $region17: #{fwd.3} parent=11 // pred_check
        %p139 = pneg %p93
      $region18: #{fwd.3} parent=11 // pred_check_branch
        %141 = sbr.rel (%p139) target = $region20
      $region19: #{fwd.3} parent=11 // pred_region
        _
      $region20: #{fwd.3} parent=11 // pred_fallthru
        _
    $region12: #{fwd.3} parent=5 // pred_fallthru
      _
    %p142 = scmp.lt.s32.totalorder %s11, 4
    // Predicated region
    $region21: #{fwd.3} parent=5 // pred_check
      %p143 = pneg %p142
    $region22: #{fwd.3} parent=5 // pred_check_branch
      %145 = sbr.rel (%p143) target = $region24
    $region23: #{fwd.3} parent=5 // pred_region
      // Predicated region
      $region25: #{fwd.3} parent=23 // pred_check
        %p146 = pneg %p45
      $region26: #{fwd.3} parent=23 // pred_check_branch
        %148 = sbr.rel (%p146) target = $region28
      $region27: #{fwd.3} parent=23 // pred_region
        %p149 = scmp.lt.s32.totalorder %s18, 1
        %s150 = scalar_select %p149, %s18, 1
        %p151 = scmp.lt.s32.totalorder %s19, 1
        %s152 = scalar_select %p151, %s19, 1
        %s153 = smul.addr %s150, 2
        %s154 = sadd.s32 %s152, %s153
        %s155 = smul.addr %s154, 4
        %s156 = scalar_lea.vmem %s0, %s155
      $region28: #{fwd.3} parent=23 // pred_fallthru
        _
    $region24: #{fwd.3} parent=5 // pred_fallthru
      _
    %p157 = scmp.le.s32.totalorder 1, %s11
    %p158 = scmp.lt.s32.totalorder %s11, 5
    %p159 = pnand %p157, %p158
    %p160 = pneg %p159
    // Predicated region
    $region29: #{fwd.3} parent=5 // pred_check
      _
    $region30: #{fwd.3} parent=5 // pred_check_branch
      %162 = sbr.rel (%p159) target = $region32
    $region31: #{fwd.3} parent=5 // pred_region
      %s163 = ssub.s32 %s11, 1
      %p164 = scmp.lt.s32.totalorder %s20, 1
      %s165 = scalar_select %p164, %s20, 1
      %p166 = scmp.lt.s32.totalorder %s21, 1
      %s167 = scalar_select %p166, %s21, 1
      %s168 = smul.addr %s165, 2
      %s169 = sadd.s32 %s167, %s168
      %s170 = smul.addr %s169, 4
      %s171 = scalar_lea.vmem %s0, %s170
      %p172 = pneg %p51
      %p173 = pneg %p48
      %p174 = pneg %p72
      %p175 = pneg %p69
      %p176 = pneg %p93
      %p177 = pneg %p90
      %p178 = pneg %p121
      %p179 = pneg %p118
      %p180 = scmp.lt.s32.totalorder %s20, 1
      %s181 = scalar_select %p180, %s20, 1
      %p182 = scmp.lt.s32.totalorder %s21, 1
      %s183 = scalar_select %p182, %s21, 1
      %s184 = smul.addr %s181, 2
      %s185 = sadd.s32 %s183, %s184
      %s186 = scalar_lea.vmem %s3, %s185
      %p187 = scmp.lt.s32.totalorder %s20, 1
      %s188 = scalar_select %p187, %s20, 1
      %p189 = scmp.lt.s32.totalorder %s21, 1
      %s190 = scalar_select %p189, %s21, 1
      %s191 = smul.addr %s188, 2
      %s192 = sadd.s32 %s190, %s191
      %s193 = smul.addr %s192, 4
      %s194 = scalar_lea.vmem %s0, %s193
      %p195 = scmp.lt.s32.totalorder %s20, 1
      %s196 = scalar_select %p195, %s20, 1
      %p197 = scmp.lt.s32.totalorder %s21, 1
      %s198 = scalar_select %p197, %s21, 1
      %s199 = smul.addr %s196, 2
      %s200 = sadd.s32 %s198, %s199
      %s201 = scalar_lea.vmem %s3, %s200
      %v203 = vld [vmem:[%s1] sm:$0x1]
      %v204 = vld [vmem:[%s194] sm:$0xf]
      %v205 = vld [vmem:[#allocation2] sm:$0x1]
      %207 = vset.pattern.permute.xlu0 0
      %208 = vperm.xlu0 %207, %v205
      %v209 = vpop.permute.xlu0 %208
      %v211 = vlaneseq
      %v212 = vshrl.u32 %v211, 7
      %v213 = vsub.s32 0, %v212
      %v214 = vrot.slane %v209, %v213
      %vm215 = vcmask 64512
      %v217 = vsel %vm215, %v203, 0
      %vm219 = vcmask 1043456
      %v221 = vsel %vm219, %v204, 0
      %223 = vmatprep.subr.bf16.mxu0 0
      %224 = vmatpush1.bf16.msra.mxu0 %v221
      %225 = vmatprep.subr.bf16.mxu0 0
      %226 = vmatpush1.bf16.msra.mxu0 0
      %227 = vmatprep.subr.bf16.mxu0 0
      %228 = vmatpush1.bf16.msra.mxu0 0
      %229 = vmatprep.subr.bf16.mxu0 0
      %230 = vmatpush1.bf16.msra.mxu0 0
      %231 = vmatprep.subr.bf16.mxu0 0
      %232 = vmatpush1.bf16.msra.mxu0 0
      %233 = vmatprep.subr.bf16.mxu0 0
      %234 = vmatpush1.bf16.msra.mxu0 0
      %235 = vmatprep.subr.bf16.mxu0 0
      %236 = vmatpush1.bf16.msra.mxu0 0
      %237 = vmatprep.subr.bf16.mxu0 0
      %238 = vmatpush1.bf16.msra.mxu0 0
      %239 = vmatprep.subr.bf16.mxu0 0
      %240 = vmatpush1.bf16.msra.mxu0 0
      %241 = vmatprep.subr.bf16.mxu0 0
      %242 = vmatpush1.bf16.msra.mxu0 0
      %243 = vmatprep.subr.bf16.mxu0 0
      %244 = vmatpush1.bf16.msra.mxu0 0
      %245 = vmatprep.subr.bf16.mxu0 0
      %246 = vmatpush1.bf16.msra.mxu0 0
      %247 = vmatprep.subr.bf16.mxu0 0
      %248 = vmatpush1.bf16.msra.mxu0 0
      %249 = vmatprep.subr.bf16.mxu0 0
      %250 = vmatpush1.bf16.msra.mxu0 0
      %251 = vmatprep.subr.bf16.mxu0 0
      %252 = vmatpush1.bf16.msra.mxu0 0
      %253 = vmatprep.subr.bf16.mxu0 0
      %254 = vmatpush1.bf16.msra.mxu0 0
      %255 = vmatprep.mubr.bf16.mxu0 0
      %256 = vmatmul.mubr.bf16.gmra.mrb[0].mxu0 %v217
      %v257 = vpop.f32.mrb[0].mxu0
      %v258 = vadd.f32 %v214, %v257
      %v259 = vpop.f32.mrb[0].mxu0
      %v260 = vpop.f32.mrb[0].mxu0
      %v261 = vpop.f32.mrb[0].mxu0
      %262 = vdwg.mxu0
      %263 = vst [vmem:[%s201] sm:$0x1] %v258
      %p264 = scmp.lt.s32.totalorder %s20, 1
      %s265 = scalar_select %p264, %s20, 1
      %p266 = scmp.lt.s32.totalorder %s21, 1
      %s267 = scalar_select %p266, %s21, 1
      %s268 = smul.addr %s265, 2
      %s269 = sadd.s32 %s267, %s268
      %s270 = scalar_lea.vmem %s3, %s269
      // Predicated region
      $region33: #{fwd.3} parent=31 // pred_check
        %p271 = pneg %p118
      $region34: #{fwd.3} parent=31 // pred_check_branch
        %273 = sbr.rel (%p271) target = $region36
      $region35: #{fwd.3} parent=31 // pred_region
        _
      $region36: #{fwd.3} parent=31 // pred_fallthru
        _
    $region32: #{fwd.3} parent=5 // pred_fallthru
      _
    %p274 = scmp.le.s32.totalorder 2, %s11
    // Predicated region
    $region37: #{fwd.3} parent=5 // pred_check
      %p275 = pneg %p274
    $region38: #{fwd.3} parent=5 // pred_check_branch
      %277 = sbr.rel (%p275) target = $region40
    $region39: #{fwd.3} parent=5 // pred_region
      %s278 = ssub.s32 %s11, 2
      // Predicated region
      $region41: #{fwd.3} parent=39 // pred_check
        %p279 = pneg %p124
      $region42: #{fwd.3} parent=39 // pred_check_branch
        %281 = sbr.rel (%p279) target = $region44
      $region43: #{fwd.3} parent=39 // pred_region
        %p282 = scmp.lt.s32.totalorder %s22, 1
        %s283 = scalar_select %p282, %s22, 1
        %p284 = scmp.lt.s32.totalorder %s23, 1
        %s285 = scalar_select %p284, %s23, 1
        %s286 = smul.addr %s283, 2
        %s287 = sadd.s32 %s285, %s286
        %s288 = scalar_lea.vmem %s3, %s287
      $region44: #{fwd.3} parent=39 // pred_fallthru
        _
    $region40: #{fwd.3} parent=5 // pred_fallthru
      _
  $region6: #{fwd.3} parent=0 // loop_footer
    %s15 = sadd.s32 1, %s11
  $region7: #{fwd.3} parent=0 // loop_footer_branch
    %10 = sbr.rel target = $region3
  $region8: #{fwd.3} parent=0 // loop_exit
    _

// kernel: fwd.2
$region0: #{fwd.2}
  #allocation0 [shape = 'u32[]', space=smem, size = 0x4, offset = 0x4, fixed_abs, tag = 'smem constant byte address 0x4 - core index']
  #allocation1 [shape = 'u32[144,128]{1,0:T(1,128)}', space=vmem, size = 0x12000, scoped, tag = 'internal scratch']
  #allocation2 [shape = 'bf16[36,144]{1,0:T(8,128)(2,1)}', space=vmem, size = 0x5000, scoped, tag = 'scratch operand']
  %s0 = inlined_call_operand.vmem [shape: bf16[2,2,4,182], index: 0, kind: input, shape index: {}]
  %s1 = inlined_call_operand.vmem [shape: bf16[8,36], index: 1, kind: input, shape index: {}]
  %s2 = inlined_call_operand.vmem [shape: f32[8,1], index: 2, kind: input, shape index: {}]
  %s3 = inlined_call_operand.vmem [shape: bf16[2,8,2,8,16], index: 3, kind: output, shape index: {}]
  %s4 = sld [smem:[#allocation0]]
  $region82: #{fwd.2} parent=0
    _
  %s6 = ssub.s32 1, %s4
  %s7 = scalar_select 0, %s6, %s4
  $region1: #{fwd.2} parent=0
    #allocation3 [shape = 'u8[32768]{0}', space=vmem, size = 0x8000, scoped, tag = 'output window, operand 0']
    loop: start=0, step=1, limit=6
    $region2: #{fwd.2} parent=1 // loop_pre_header
      _
    $region3: #{fwd.2} parent=1 // loop_header
      %s9 = sphi 0, %s13
      %p10 = scmp.ge.s32.totalorder %s9, 6
      %s16 = sphi 0, %s28
      %s17 = sphi 0, %s24
      %s18 = sphi 0, %s16
      %s19 = sphi 0, %s17
      %s20 = sphi 0, %s18
      %s21 = sphi 0, %s19
      %s33 = sphi 0, %s35
      %s36 = sphi 0, %s33
      %s37 = sphi 0, %s36
      %s53 = sphi 0, %s37
      %s57 = sphi 0, %s57
      %s59 = sphi 0, %s57
      %s60 = sphi 0, %s59
      %s74 = sphi 0, %s60
      %s78 = sphi 0, %s78
      %s80 = sphi 0, %s78
      %s81 = sphi 0, %s80
      %s95 = sphi 0, %s81
      %s103 = sphi 0, %s105
      %s106 = sphi 0, %s103
      %s107 = sphi 0, %s106
      %s123 = sphi 0, %s107
    $region4: #{fwd.2} parent=1 // loop_header_branch
      %12 = sbr.rel (%p10) target = $region8
    $region5: #{fwd.2} parent=1 // loop_body
      %s14 = ssub.s32 %s9, 1
      %s15 = ssub.s32 %s9, 2
      %s22 = sadd.s32 1, %s17
      %p23 = scmp.ge.s32.totalorder %s22, 2
      %s24 = scalar_select %p23, 0, %s22
      %s25 = sadd.s32 1, %s16
      %s26 = scalar_select %p23, %s25, %s16
      %p27 = scmp.ge.s32.totalorder %s26, 2
      %s28 = scalar_select %p27, 0, %s26
      %s29 = ssub.s32 %s16, %s28
      %s30 = ssub.s32 %s17, %s24
      %s31 = sor.u32 %s29, %s30
      %p32 = scmp.eq.s32.totalorder %s31, 0
      %s34 = sadd.s32 %s33, 1
      %s35 = scalar_select %p32, %s33, %s34
      %p38 = pneg %p32
      %p39 = scmp.eq.s32.totalorder %s9, 3
      %p40 = por %p38, %p39
      %p41 = scmp.ne.s32.totalorder %s33, %s36
      %p42 = scmp.eq.s32.totalorder %s9, 0
      %p43 = por %p41, %p42
      %p44 = scmp.ne.s32.totalorder %s33, %s36
      %p45 = scmp.eq.s32.totalorder %s14, 3
      %p46 = por %p44, %p45
      %p47 = scmp.ne.s32.totalorder %s36, %s37
      %p48 = scmp.eq.s32.totalorder %s14, 0
      %p49 = por %p47, %p48
      %p50 = scmp.ne.s32.totalorder %s36, %s37
      %p51 = scmp.eq.s32.totalorder %s15, 3
      %p52 = por %p50, %p51
      %p54 = scmp.ne.s32.totalorder %s37, %s53
      %p55 = scmp.eq.s32.totalorder %s15, 0
      %p56 = por %p54, %p55
      %s58 = sadd.s32 %s57, 1
      %p61 = scmp.eq.s32.totalorder %s9, 3
      %p62 = scmp.ne.s32.totalorder %s57, %s59
      %p63 = scmp.eq.s32.totalorder %s9, 0
      %p64 = por %p62, %p63
      %p65 = scmp.ne.s32.totalorder %s57, %s59
      %p66 = scmp.eq.s32.totalorder %s14, 3
      %p67 = por %p65, %p66
      %p68 = scmp.ne.s32.totalorder %s59, %s60
      %p69 = scmp.eq.s32.totalorder %s14, 0
      %p70 = por %p68, %p69
      %p71 = scmp.ne.s32.totalorder %s59, %s60
      %p72 = scmp.eq.s32.totalorder %s15, 3
      %p73 = por %p71, %p72
      %p75 = scmp.ne.s32.totalorder %s60, %s74
      %p76 = scmp.eq.s32.totalorder %s15, 0
      %p77 = por %p75, %p76
      %s79 = sadd.s32 %s78, 1
      %p82 = scmp.eq.s32.totalorder %s9, 3
      %p83 = scmp.ne.s32.totalorder %s78, %s80
      %p84 = scmp.eq.s32.totalorder %s9, 0
      %p85 = por %p83, %p84
      %p86 = scmp.ne.s32.totalorder %s78, %s80
      %p87 = scmp.eq.s32.totalorder %s14, 3
      %p88 = por %p86, %p87
      %p89 = scmp.ne.s32.totalorder %s80, %s81
      %p90 = scmp.eq.s32.totalorder %s14, 0
      %p91 = por %p89, %p90
      %p92 = scmp.ne.s32.totalorder %s80, %s81
      %p93 = scmp.eq.s32.totalorder %s15, 3
      %p94 = por %p92, %p93
      %p96 = scmp.ne.s32.totalorder %s81, %s95
      %p97 = scmp.eq.s32.totalorder %s15, 0
      %p98 = por %p96, %p97
      %s99 = ssub.s32 %s16, %s28
      %s100 = ssub.s32 %s17, %s24
      %s101 = sor.u32 %s99, %s100
      %p102 = scmp.eq.s32.totalorder %s101, 0
      %s104 = sadd.s32 %s103, 1
      %s105 = scalar_select %p102, %s103, %s104
      %p108 = pneg %p102
      %p109 = scmp.eq.s32.totalorder %s9, 3
      %p110 = por %p108, %p109
      %p111 = scmp.ne.s32.totalorder %s103, %s106
      %p112 = scmp.eq.s32.totalorder %s9, 0
      %p113 = por %p111, %p112
      %p114 = scmp.ne.s32.totalorder %s103, %s106
      %p115 = scmp.eq.s32.totalorder %s14, 3
      %p116 = por %p114, %p115
      %p117 = scmp.ne.s32.totalorder %s106, %s107
      %p118 = scmp.eq.s32.totalorder %s14, 0
      %p119 = por %p117, %p118
      %p120 = scmp.ne.s32.totalorder %s106, %s107
      %p121 = scmp.eq.s32.totalorder %s15, 3
      %p122 = por %p120, %p121
      %p124 = scmp.ne.s32.totalorder %s107, %s123
      %p125 = scmp.eq.s32.totalorder %s15, 0
      %p126 = por %p124, %p125
      %p127 = scmp.le.s32.totalorder 1, %s9
      %p128 = scmp.lt.s32.totalorder %s9, 5
      %p129 = pnand %p127, %p128
      %p130 = pneg %p129
      // Predicated region
      $region9: #{fwd.2} parent=5 // pred_check
        _
      $region10: #{fwd.2} parent=5 // pred_check_branch
        %132 = sbr.rel (%p129) target = $region12
      $region11: #{fwd.2} parent=5 // pred_region
        %s133 = ssub.s32 %s9, 1
        // Predicated region
        $region13: #{fwd.2} parent=11 // pred_check
          %p134 = pneg %p70
        $region14: #{fwd.2} parent=11 // pred_check_branch
          %136 = sbr.rel (%p134) target = $region16
        $region15: #{fwd.2} parent=11 // pred_region
          _
        $region16: #{fwd.2} parent=11 // pred_fallthru
          _
        // Predicated region
        $region17: #{fwd.2} parent=11 // pred_check
          %p137 = pneg %p91
        $region18: #{fwd.2} parent=11 // pred_check_branch
          %139 = sbr.rel (%p137) target = $region20
        $region19: #{fwd.2} parent=11 // pred_region
          _
        $region20: #{fwd.2} parent=11 // pred_fallthru
          _
      $region12: #{fwd.2} parent=5 // pred_fallthru
        _
      %p140 = scmp.lt.s32.totalorder %s9, 4
      // Predicated region
      $region21: #{fwd.2} parent=5 // pred_check
        %p141 = pneg %p140
      $region22: #{fwd.2} parent=5 // pred_check_branch
        %143 = sbr.rel (%p141) target = $region24
      $region23: #{fwd.2} parent=5 // pred_region
        // Predicated region
        $region25: #{fwd.2} parent=23 // pred_check
          %p144 = pneg %p43
        $region26: #{fwd.2} parent=23 // pred_check_branch
          %146 = sbr.rel (%p144) target = $region28
        $region27: #{fwd.2} parent=23 // pred_region
          %p147 = scmp.lt.s32.totalorder %s16, 1
          %s148 = scalar_select %p147, %s16, 1
          %p149 = scmp.lt.s32.totalorder %s17, 1
          %s150 = scalar_select %p149, %s17, 1
          %s151 = smul.addr %s150, 2
          %s152 = smul.addr %s148, 4
          %s153 = sadd.s32 %s151, %s152
          %s154 = smul.addr %s153, 2
          %s155 = scalar_lea.vmem %s0, %s154
        $region28: #{fwd.2} parent=23 // pred_fallthru
          _
      $region24: #{fwd.2} parent=5 // pred_fallthru
        _
      %p156 = scmp.le.s32.totalorder 1, %s9
      %p157 = scmp.lt.s32.totalorder %s9, 5
      %p158 = pnand %p156, %p157
      %p159 = pneg %p158
      // Predicated region
      $region29: #{fwd.2} parent=5 // pred_check
        _
      $region30: #{fwd.2} parent=5 // pred_check_branch
        %161 = sbr.rel (%p158) target = $region32
      $region31: #{fwd.2} parent=5 // pred_region
        %s162 = ssub.s32 %s9, 1
        %p163 = scmp.lt.s32.totalorder %s18, 1
        %s164 = scalar_select %p163, %s18, 1
        %p165 = scmp.lt.s32.totalorder %s19, 1
        %s166 = scalar_select %p165, %s19, 1
        %s167 = smul.addr %s166, 2
        %s168 = smul.addr %s164, 4
        %s169 = sadd.s32 %s167, %s168
        %s170 = smul.addr %s169, 2
        %s171 = scalar_lea.vmem %s0, %s170
        %p172 = pneg %p49
        %p173 = pneg %p46
        %p174 = pneg %p70
        %p175 = pneg %p67
        %p176 = pneg %p91
        %p177 = pneg %p88
        %p178 = pneg %p119
        %p179 = pneg %p116
        %s180 = sand.u32 %s106, 1
        %s181 = sand.u32 %s106, 1
        %s182 = smul.addr %s181, 32
        %s183 = scalar_lea.vmem [#allocation3], %s182
        %p184 = scmp.lt.s32.totalorder %s18, 1
        %s185 = scalar_select %p184, %s18, 1
        %p186 = scmp.lt.s32.totalorder %s19, 1
        %s187 = scalar_select %p186, %s19, 1
        %s188 = smul.addr %s187, 2
        %s189 = smul.addr %s185, 4
        %s190 = sadd.s32 %s188, %s189
        %s191 = smul.addr %s190, 2
        %s192 = scalar_lea.vmem %s0, %s191
        %v194 = vld [vmem:[%s192] sm:$0xf]
        %v197 = vunpack.c.l.s4 1983009808
        %v198 = vunpack.c.0.s8 %v197
        %v199 = vlaneseq
        %v200 = vshrl.u32 %v199, 7
        %v201 = vsub.s32 %v198, %v200
        %v202 = vrot.slane %v194, %v201
        %vm204 = vcmask 1041408
        %vm205 = vcmask 128004
        %vm206 = vmor %vm205, %vm204
        %207 = vst.msk [vmem:[#allocation2] sm:$0x33] %vm206, %v202
        %v208 = vld [vmem:[%s192] sm:$0xf]
        %v210 = vcombine.low %v208, %v208
        %v212 = vunpack.c.l.s4 1983009808
        %v213 = vunpack.c.0.s8 %v212
        %v214 = vlaneseq
        %v215 = vshrl.u32 %v214, 7
        %v216 = vsub.s32 %v213, %v215
        %v217 = vrot.slane %v210, %v216
        %218 = vrot.lane.b32.xlu0 %v217, 127
        %v219 = vpop.permute.xlu0 %218
        %v220 = vrot.slane %v219, 4
        %vm221 = vcmask 1039360
        %v222 = vsel %vm221, %v219, %v220
        %vm224 = vcmask 1043458
        %vm225 = vcmask 130054
        %vm226 = vmor %vm225, %vm224
        %227 = vst.msk [vmem:[#allocation2] sm:$0xcc] %vm226, %v222
        %v228 = vld [vmem:[%s192] sm:$0xf]
        %v231 = vunpack.c.l.s4 1983009808
        %v232 = vunpack.c.0.s8 %v231
        %v233 = vlaneseq
        %v234 = vshrl.u32 %v233, 7
        %v235 = vsub.s32 %v232, %v234
        %v236 = vrot.slane %v228, %v235
        %237 = vrot.lane.b32.xlu0 %v236, 126
        %v238 = vpop.permute.xlu0 %237
        %v239 = vrot.slane %v238, 4
        %vm240 = vcmask 1031168
        %v241 = vsel %vm240, %v238, %v239
        %243 = vst.msk [vmem:[#allocation2 + $0x8] sm:$0x33] %vm206, %v241
        %v244 = vld [vmem:[%s192] sm:$0xf]
        %v246 = vcombine.low %v244, %v244
        %v248 = vunpack.c.l.s4 1983009808
        %v249 = vunpack.c.0.s8 %v248
        %v250 = vlaneseq
        %v251 = vshrl.u32 %v250, 7
        %v252 = vsub.s32 %v249, %v251
        %v253 = vrot.slane %v246, %v252
        %254 = vrot.lane.b32.xlu0 %v253, 110
        %v255 = vpop.permute.xlu0 %254
        %v256 = vrot.slane %v255, 4
        %vm257 = vcmask 900096
        %v258 = vsel %vm257, %v255, %v256
        %260 = vst.msk [vmem:[#allocation2 + $0x8] sm:$0xcc] %vm226, %v258
        %v261 = vld [vmem:[%s192] sm:$0xf]
        %v264 = vunpack.c.l.s4 1983009808
        %v265 = vunpack.c.0.s8 %v264
        %v266 = vlaneseq
        %v267 = vshrl.u32 %v266, 7
        %v268 = vsub.s32 %v265, %v267
        %v269 = vrot.slane %v261, %v268
        %270 = vrot.lane.b32.xlu0 %v269, 109
        %v271 = vpop.permute.xlu0 %270
        %v272 = vrot.slane %v271, 4
        %vm273 = vcmask 891904
        %v274 = vsel %vm273, %v271, %v272
        %276 = vst.msk [vmem:[#allocation2 + $0x10] sm:$0x33] %vm206, %v274
        %v277 = vld [vmem:[%s192] sm:$0xf]
        %v279 = vcombine.low %v277, %v277
        %v281 = vunpack.c.l.s4 1983009808
        %v282 = vunpack.c.0.s8 %v281
        %v283 = vlaneseq
        %v284 = vshrl.u32 %v283, 7
        %v285 = vsub.s32 %v282, %v284
        %v286 = vrot.slane %v279, %v285
        %287 = vrot.lane.b32.xlu0 %v286, 108
        %v288 = vpop.permute.xlu0 %287
        %v289 = vrot.slane %v288, 4
        %vm290 = vcmask 883712
        %v291 = vsel %vm290, %v288, %v289
        %293 = vst.msk [vmem:[#allocation2 + $0x10] sm:$0xcc] %vm226, %v291
        %v294 = vld [vmem:[%s192] sm:$0xf]
        %v297 = vunpack.c.l.s4 1983009808
        %v298 = vunpack.c.0.s8 %v297
        %v299 = vlaneseq
        %v300 = vshrl.u32 %v299, 7
        %v301 = vsub.s32 %v298, %v300
        %v302 = vrot.slane %v294, %v301
        %303 = vrot.lane.b32.xlu0 %v302, 92
        %v304 = vpop.permute.xlu0 %303
        %v305 = vrot.slane %v304, 4
        %vm306 = vcmask 752640
        %v307 = vsel %vm306, %v304, %v305
        %309 = vst.msk [vmem:[#allocation2 + $0x18] sm:$0x33] %vm206, %v307
        %v310 = vld [vmem:[%s192] sm:$0xf]
        %v312 = vcombine.low %v310, %v310
        %v314 = vunpack.c.l.s4 1983009808
        %v315 = vunpack.c.0.s8 %v314
        %v316 = vlaneseq
        %v317 = vshrl.u32 %v316, 7
        %v318 = vsub.s32 %v315, %v317
        %v319 = vrot.slane %v312, %v318
        %320 = vrot.lane.b32.xlu0 %v319, 91
        %v321 = vpop.permute.xlu0 %320
        %v322 = vrot.slane %v321, 4
        %vm323 = vcmask 744448
        %v324 = vsel %vm323, %v321, %v322
        %326 = vst.msk [vmem:[#allocation2 + $0x18] sm:$0xcc] %vm226, %v324
        %v327 = vld [vmem:[%s192] sm:$0xf]
        %v330 = vunpack.c.l.s4 1983009808
        %v331 = vunpack.c.0.s8 %v330
        %v332 = vlaneseq
        %v333 = vshrl.u32 %v332, 7
        %v334 = vsub.s32 %v331, %v333
        %v335 = vrot.slane %v327, %v334
        %336 = vrot.lane.b32.xlu0 %v335, 90
        %v337 = vpop.permute.xlu0 %336
        %v338 = vrot.slane %v337, 4
        %vm339 = vcmask 736256
        %v340 = vsel %vm339, %v337, %v338
        %342 = vst.msk [vmem:[#allocation2 + $0x20] sm:$0x33] %vm206, %v340
        %v343 = vld [vmem:[%s1] sm:$0xf]
        %v344 = vld [vmem:[#allocation2] sm:$0xff]
        %v345 = vld [vmem:[#allocation2 + $0x8] sm:$0xff]
        %v346 = vld [vmem:[#allocation2 + $0x10] sm:$0xff]
        %v347 = vld [vmem:[#allocation2 + $0x18] sm:$0xff]
        %v348 = vld [vmem:[#allocation2 + $0x20] sm:$0x33]
        %v349 = vld [vmem:[%s2] sm:$0xff]
        %351 = vset.pattern.permute.xlu0 0
        %352 = vperm.xlu0 %351, %v349
        %v353 = vpop.permute.xlu0 %352
        %v360 = vunpack.c.l.b16 %v344
        %v361 = vunpack.c.h.b16 %v344
        %v362 = vunpack.c.l.b16 %v345
        %v363 = vunpack.c.h.b16 %v345
        %v364 = vunpack.c.l.b16 %v346
        %v365 = vunpack.c.h.b16 %v346
        %v366 = vunpack.c.l.b16 %v347
        %v367 = vunpack.c.h.b16 %v347
        %v368 = vunpack.c.l.b16 %v348
        %v369 = vunpack.c.h.b16 %v348
        %v370 = vpack.c.b16 %v362, %v360
        %v371 = vpack.c.b16 %v363, %v361
        %v372 = vpack.c.b16 %v366, %v364
        %v373 = vpack.c.b16 %v367, %v365
        %v374 = vpack.c.b16 %v368, %v368
        %v375 = vpack.c.b16 %v369, %v369
        %vm380 = vcmask 293888
        %v382 = vsel %vm380, %v343, 0
        %v385 = vsel %vm204, %v374, 0
        %v388 = vsel %vm204, %v375, 0
        %390 = vmatprep.subr.bf16.mxu0 %v371
        %391 = vmatpush1.bf16.msra.mxu0 %v370
        %392 = vmatprep.subr.bf16.mxu0 %v373
        %393 = vmatpush1.bf16.msra.mxu0 %v372
        %394 = vmatprep.subr.bf16.mxu0 %v388
        %395 = vmatpush1.bf16.msra.mxu0 %v385
        %396 = vmatprep.subr.bf16.mxu0 0
        %397 = vmatpush1.bf16.msra.mxu0 0
        %398 = vmatprep.subr.bf16.mxu0 0
        %399 = vmatpush1.bf16.msra.mxu0 0
        %400 = vmatprep.subr.bf16.mxu0 0
        %401 = vmatpush1.bf16.msra.mxu0 0
        %402 = vmatprep.subr.bf16.mxu0 0
        %403 = vmatpush1.bf16.msra.mxu0 0
        %404 = vmatprep.subr.bf16.mxu0 0
        %405 = vmatpush1.bf16.msra.mxu0 0
        %406 = vmatprep.subr.bf16.mxu0 0
        %407 = vmatpush1.bf16.msra.mxu0 0
        %408 = vmatprep.subr.bf16.mxu0 0
        %409 = vmatpush1.bf16.msra.mxu0 0
        %410 = vmatprep.subr.bf16.mxu0 0
        %411 = vmatpush1.bf16.msra.mxu0 0
        %412 = vmatprep.subr.bf16.mxu0 0
        %413 = vmatpush1.bf16.msra.mxu0 0
        %414 = vmatprep.subr.bf16.mxu0 0
        %415 = vmatpush1.bf16.msra.mxu0 0
        %416 = vmatprep.subr.bf16.mxu0 0
        %417 = vmatpush1.bf16.msra.mxu0 0
        %418 = vmatprep.subr.bf16.mxu0 0
        %419 = vmatpush1.bf16.msra.mxu0 0
        %420 = vmatprep.subr.bf16.mxu0 0
        %421 = vmatpush1.bf16.msra.mxu0 0
        %422 = vmatprep.mubr.bf16.mxu0 0
        %423 = vmatmul.mubr.bf16.gmra.mrb[0].mxu0 %v382
        %v424 = vpop.f32.mrb[0].mxu0
        %v425 = vadd.f32 %v353, %v424
        %v426 = vpop.f32.mrb[0].mxu0
        %v427 = vadd.f32 %v353, %v426
        %v428 = vpop.f32.mrb[0].mxu0
        %v429 = vpop.f32.mrb[0].mxu0
        %430 = vdwg.mxu0
        %vm431 = vcmp.ge.f32.partialorder %v425, 0.0
        %vm432 = vcmp.ge.f32.partialorder %v427, 0.0
        %v433 = vmul.f32 %v425, 0.01
        %v434 = vmul.f32 %v427, 0.01
        %v435 = vsel %vm431, %v425, %v433
        %v436 = vsel %vm432, %v427, %v434
        %v437 = vpack.c.bf16 %v435, %v435
        %v438 = vpack.c.bf16 %v436, %v436
        %v441 = vunpack.c.l.s4 1966171168
        %v442 = vunpack.c.0.s8 %v441
        %v443 = vlaneseq
        %v444 = vshrl.u32 %v443, 7
        %v445 = vsub.s32 %v442, %v444
        %v446 = vrot.slane %v437, %v445
        %v447 = vcombine.high %v446, %v446
        %v449 = vunpack.c.l.s4 1966171168
        %v450 = vunpack.c.0.s8 %v449
        %v451 = vlaneseq
        %v452 = vshrl.u32 %v451, 7
        %v453 = vsub.s32 %v450, %v452
        %v454 = vrot.slane %v446, %v453
        %v456 = vunpack.c.l.s4 1966171168
        %v457 = vunpack.c.0.s8 %v456
        %v458 = vlaneseq
        %v459 = vshrl.u32 %v458, 7
        %v460 = vsub.s32 %v457, %v459
        %v461 = vrot.slane %v447, %v460
        %v462 = vcombine.high %v454, %v454
        %v463 = vcombine.high %v461, %v461
        %v464 = vunpack.i.l.s16 %v454
        %v465 = vunpack.i.h.s16 %v454
        %v466 = vunpack.i.l.s16 %v461
        %v467 = vunpack.i.h.s16 %v461
        %v468 = vunpack.i.l.s16 %v462
        %v469 = vunpack.i.h.s16 %v462
        %v470 = vunpack.i.l.s16 %v463
        %v471 = vunpack.i.h.s16 %v463
        %v472 = vpack.i.b16 %v464, %v464
        %v473 = vpack.i.b16 %v465, %v465
        %v474 = vpack.i.b16 %v466, %v466
        %v475 = vpack.i.b16 %v467, %v467
        %v476 = vpack.i.b16 %v468, %v468
        %v477 = vpack.i.b16 %v469, %v469
        %v478 = vpack.i.b16 %v470, %v470
        %v479 = vpack.i.b16 %v471, %v471
        %v481 = vunpack.c.l.s4 286326784
        %v482 = vunpack.c.0.s8 %v481
        %v483 = vlaneseq
        %v484 = vshrl.u32 %v483, 7
        %v485 = vsub.s32 %v482, %v484
        %v486 = vrot.slane %v472, %v485
        %v488 = vunpack.c.l.s4 286326784
        %v489 = vunpack.c.0.s8 %v488
        %v490 = vlaneseq
        %v491 = vshrl.u32 %v490, 7
        %v492 = vsub.s32 %v489, %v491
        %v493 = vrot.slane %v473, %v492
        %v495 = vunpack.c.l.s4 286326784
        %v496 = vunpack.c.0.s8 %v495
        %v497 = vlaneseq
        %v498 = vshrl.u32 %v497, 7
        %v499 = vsub.s32 %v496, %v498
        %v500 = vrot.slane %v474, %v499
        %v502 = vunpack.c.l.s4 286326784
        %v503 = vunpack.c.0.s8 %v502
        %v504 = vlaneseq
        %v505 = vshrl.u32 %v504, 7
        %v506 = vsub.s32 %v503, %v505
        %v507 = vrot.slane %v475, %v506
        %v509 = vunpack.c.l.s4 286326784
        %v510 = vunpack.c.0.s8 %v509
        %v511 = vlaneseq
        %v512 = vshrl.u32 %v511, 7
        %v513 = vsub.s32 %v510, %v512
        %v514 = vrot.slane %v476, %v513
        %v516 = vunpack.c.l.s4 286326784
        %v517 = vunpack.c.0.s8 %v516
        %v518 = vlaneseq
        %v519 = vshrl.u32 %v518, 7
        %v520 = vsub.s32 %v517, %v519
        %v521 = vrot.slane %v477, %v520
        %v523 = vunpack.c.l.s4 286326784
        %v524 = vunpack.c.0.s8 %v523
        %v525 = vlaneseq
        %v526 = vshrl.u32 %v525, 7
        %v527 = vsub.s32 %v524, %v526
        %v528 = vrot.slane %v478, %v527
        %v530 = vunpack.c.l.s4 286326784
        %v531 = vunpack.c.0.s8 %v530
        %v532 = vlaneseq
        %v533 = vshrl.u32 %v532, 7
        %v534 = vsub.s32 %v531, %v533
        %v535 = vrot.slane %v479, %v534
        %vm544 = vcmask 122880
        %vm545 = vsmask.f32 256
        %vm546 = vmand %vm544, %vm545
        %v547 = vld [vmem:[%s183] sm:$0x1]
        %v548 = vsel %vm546, %v486, %v547
        %549 = vst [vmem:[%s183] sm:$0x1] %v548
        %v550 = vld [vmem:[%s183 + $0x4] sm:$0x1]
        %v551 = vsel %vm546, %v493, %v550
        %552 = vst [vmem:[%s183 + $0x4] sm:$0x1] %v551
        %v553 = vld [vmem:[%s183 + $0x8] sm:$0x1]
        %v554 = vsel %vm546, %v500, %v553
        %555 = vst [vmem:[%s183 + $0x8] sm:$0x1] %v554
        %v556 = vld [vmem:[%s183 + $0xc] sm:$0x1]
        %v557 = vsel %vm546, %v507, %v556
        %558 = vst [vmem:[%s183 + $0xc] sm:$0x1] %v557
        %v559 = vld [vmem:[%s183 + $0x10] sm:$0x1]
        %v560 = vsel %vm546, %v514, %v559
        %561 = vst [vmem:[%s183 + $0x10] sm:$0x1] %v560
        %v562 = vld [vmem:[%s183 + $0x14] sm:$0x1]
        %v563 = vsel %vm546, %v521, %v562
        %564 = vst [vmem:[%s183 + $0x14] sm:$0x1] %v563
        %v565 = vld [vmem:[%s183 + $0x18] sm:$0x1]
        %v566 = vsel %vm546, %v528, %v565
        %567 = vst [vmem:[%s183 + $0x18] sm:$0x1] %v566
        %v568 = vld [vmem:[%s183 + $0x1c] sm:$0x1]
        %v569 = vsel %vm546, %v535, %v568
        %570 = vst [vmem:[%s183 + $0x1c] sm:$0x1] %v569
        %571 = vrot.lane.b32.xlu0 %v486, 110
        %v572 = vpop.permute.xlu0 %571
        %573 = vrot.lane.b32.xlu0 %v493, 110
        %v574 = vpop.permute.xlu0 %573
        %575 = vrot.lane.b32.xlu0 %v500, 110
        %v576 = vpop.permute.xlu0 %575
        %577 = vrot.lane.b32.xlu0 %v507, 110
        %v578 = vpop.permute.xlu0 %577
        %579 = vrot.lane.b32.xlu0 %v514, 110
        %v580 = vpop.permute.xlu0 %579
        %581 = vrot.lane.b32.xlu0 %v521, 110
        %v582 = vpop.permute.xlu0 %581
        %583 = vrot.lane.b32.xlu0 %v528, 110
        %v584 = vpop.permute.xlu0 %583
        %585 = vrot.lane.b32.xlu0 %v535, 110
        %v586 = vpop.permute.xlu0 %585
        %vm595 = vsmask.f32 7938
        %vm596 = vmand %vm544, %vm595
        %v597 = vld [vmem:[%s183] sm:$0x1]
        %v598 = vsel %vm596, %v572, %v597
        %599 = vst [vmem:[%s183] sm:$0x1] %v598
        %v600 = vld [vmem:[%s183 + $0x4] sm:$0x1]
        %v601 = vsel %vm596, %v574, %v600
        %602 = vst [vmem:[%s183 + $0x4] sm:$0x1] %v601
        %v603 = vld [vmem:[%s183 + $0x8] sm:$0x1]
        %v604 = vsel %vm596, %v576, %v603
        %605 = vst [vmem:[%s183 + $0x8] sm:$0x1] %v604
        %v606 = vld [vmem:[%s183 + $0xc] sm:$0x1]
        %v607 = vsel %vm596, %v578, %v606
        %608 = vst [vmem:[%s183 + $0xc] sm:$0x1] %v607
        %v609 = vld [vmem:[%s183 + $0x10] sm:$0x1]
        %v610 = vsel %vm596, %v580, %v609
        %611 = vst [vmem:[%s183 + $0x10] sm:$0x1] %v610
        %v612 = vld [vmem:[%s183 + $0x14] sm:$0x1]
        %v613 = vsel %vm596, %v582, %v612
        %614 = vst [vmem:[%s183 + $0x14] sm:$0x1] %v613
        %v615 = vld [vmem:[%s183 + $0x18] sm:$0x1]
        %v616 = vsel %vm596, %v584, %v615
        %617 = vst [vmem:[%s183 + $0x18] sm:$0x1] %v616
        %v618 = vld [vmem:[%s183 + $0x1c] sm:$0x1]
        %v619 = vsel %vm596, %v586, %v618
        %620 = vst [vmem:[%s183 + $0x1c] sm:$0x1] %v619
        %621 = vrot.lane.b32.xlu0 %v486, 92
        %v622 = vpop.permute.xlu0 %621
        %623 = vrot.lane.b32.xlu0 %v493, 92
        %v624 = vpop.permute.xlu0 %623
        %625 = vrot.lane.b32.xlu0 %v500, 92
        %v626 = vpop.permute.xlu0 %625
        %627 = vrot.lane.b32.xlu0 %v507, 92
        %v628 = vpop.permute.xlu0 %627
        %629 = vrot.lane.b32.xlu0 %v514, 92
        %v630 = vpop.permute.xlu0 %629
        %631 = vrot.lane.b32.xlu0 %v521, 92
        %v632 = vpop.permute.xlu0 %631
        %633 = vrot.lane.b32.xlu0 %v528, 92
        %v634 = vpop.permute.xlu0 %633
        %635 = vrot.lane.b32.xlu0 %v535, 92
        %v636 = vpop.permute.xlu0 %635
        %vm645 = vcmask 123905
        %vm646 = vsmask.f32 1280
        %vm647 = vmand %vm645, %vm646
        %v648 = vld [vmem:[%s183] sm:$0x2]
        %v649 = vsel %vm647, %v622, %v648
        %650 = vst [vmem:[%s183] sm:$0x2] %v649
        %v651 = vld [vmem:[%s183 + $0x4] sm:$0x2]
        %v652 = vsel %vm647, %v624, %v651
        %653 = vst [vmem:[%s183 + $0x4] sm:$0x2] %v652
        %v654 = vld [vmem:[%s183 + $0x8] sm:$0x2]
        %v655 = vsel %vm647, %v626, %v654
        %656 = vst [vmem:[%s183 + $0x8] sm:$0x2] %v655
        %v657 = vld [vmem:[%s183 + $0xc] sm:$0x2]
        %v658 = vsel %vm647, %v628, %v657
        %659 = vst [vmem:[%s183 + $0xc] sm:$0x2] %v658
        %v660 = vld [vmem:[%s183 + $0x10] sm:$0x2]
        %v661 = vsel %vm647, %v630, %v660
        %662 = vst [vmem:[%s183 + $0x10] sm:$0x2] %v661
        %v663 = vld [vmem:[%s183 + $0x14] sm:$0x2]
        %v664 = vsel %vm647, %v632, %v663
        %665 = vst [vmem:[%s183 + $0x14] sm:$0x2] %v664
        %v666 = vld [vmem:[%s183 + $0x18] sm:$0x2]
        %v667 = vsel %vm647, %v634, %v666
        %668 = vst [vmem:[%s183 + $0x18] sm:$0x2] %v667
        %v669 = vld [vmem:[%s183 + $0x1c] sm:$0x2]
        %v670 = vsel %vm647, %v636, %v669
        %671 = vst [vmem:[%s183 + $0x1c] sm:$0x2] %v670
        %672 = vrot.lane.b32.xlu0 %v486, 74
        %v673 = vpop.permute.xlu0 %672
        %674 = vrot.lane.b32.xlu0 %v493, 74
        %v675 = vpop.permute.xlu0 %674
        %676 = vrot.lane.b32.xlu0 %v500, 74
        %v677 = vpop.permute.xlu0 %676
        %678 = vrot.lane.b32.xlu0 %v507, 74
        %v679 = vpop.permute.xlu0 %678
        %680 = vrot.lane.b32.xlu0 %v514, 74
        %v681 = vpop.permute.xlu0 %680
        %682 = vrot.lane.b32.xlu0 %v521, 74
        %v683 = vpop.permute.xlu0 %682
        %684 = vrot.lane.b32.xlu0 %v528, 74
        %v685 = vpop.permute.xlu0 %684
        %686 = vrot.lane.b32.xlu0 %v535, 74
        %v687 = vpop.permute.xlu0 %686
        %vm696 = vsmask.f32 7942
        %vm697 = vmand %vm645, %vm696
        %v698 = vld [vmem:[%s183] sm:$0x2]
        %v699 = vsel %vm697, %v673, %v698
        %700 = vst [vmem:[%s183] sm:$0x2] %v699
        %v701 = vld [vmem:[%s183 + $0x4] sm:$0x2]
        %v702 = vsel %vm697, %v675, %v701
        %703 = vst [vmem:[%s183 + $0x4] sm:$0x2] %v702
        %v704 = vld [vmem:[%s183 + $0x8] sm:$0x2]
        %v705 = vsel %vm697, %v677, %v704
        %706 = vst [vmem:[%s183 + $0x8] sm:$0x2] %v705
        %v707 = vld [vmem:[%s183 + $0xc] sm:$0x2]
        %v708 = vsel %vm697, %v679, %v707
        %709 = vst [vmem:[%s183 + $0xc] sm:$0x2] %v708
        %v710 = vld [vmem:[%s183 + $0x10] sm:$0x2]
        %v711 = vsel %vm697, %v681, %v710
        %712 = vst [vmem:[%s183 + $0x10] sm:$0x2] %v711
        %v713 = vld [vmem:[%s183 + $0x14] sm:$0x2]
        %v714 = vsel %vm697, %v683, %v713
        %715 = vst [vmem:[%s183 + $0x14] sm:$0x2] %v714
        %v716 = vld [vmem:[%s183 + $0x18] sm:$0x2]
        %v717 = vsel %vm697, %v685, %v716
        %718 = vst [vmem:[%s183 + $0x18] sm:$0x2] %v717
        %v719 = vld [vmem:[%s183 + $0x1c] sm:$0x2]
        %v720 = vsel %vm697, %v687, %v719
        %721 = vst [vmem:[%s183 + $0x1c] sm:$0x2] %v720
        %722 = vrot.lane.b32.xlu0 %v486, 56
        %v723 = vpop.permute.xlu0 %722
        %724 = vrot.lane.b32.xlu0 %v493, 56
        %v725 = vpop.permute.xlu0 %724
        %726 = vrot.lane.b32.xlu0 %v500, 56
        %v727 = vpop.permute.xlu0 %726
        %728 = vrot.lane.b32.xlu0 %v507, 56
        %v729 = vpop.permute.xlu0 %728
        %730 = vrot.lane.b32.xlu0 %v514, 56
        %v731 = vpop.permute.xlu0 %730
        %732 = vrot.lane.b32.xlu0 %v521, 56
        %v733 = vpop.permute.xlu0 %732
        %734 = vrot.lane.b32.xlu0 %v528, 56
        %v735 = vpop.permute.xlu0 %734
        %736 = vrot.lane.b32.xlu0 %v535, 56
        %v737 = vpop.permute.xlu0 %736
        %vm746 = vcmask 124930
        %vm747 = vsmask.f32 2304
        %vm748 = vmand %vm746, %vm747
        %v749 = vld [vmem:[%s183] sm:$0x4]
        %v750 = vsel %vm748, %v723, %v749
        %751 = vst [vmem:[%s183] sm:$0x4] %v750
        %v752 = vld [vmem:[%s183 + $0x4] sm:$0x4]
        %v753 = vsel %vm748, %v725, %v752
        %754 = vst [vmem:[%s183 + $0x4] sm:$0x4] %v753
        %v755 = vld [vmem:[%s183 + $0x8] sm:$0x4]
        %v756 = vsel %vm748, %v727, %v755
        %757 = vst [vmem:[%s183 + $0x8] sm:$0x4] %v756
        %v758 = vld [vmem:[%s183 + $0xc] sm:$0x4]
        %v759 = vsel %vm748, %v729, %v758
        %760 = vst [vmem:[%s183 + $0xc] sm:$0x4] %v759
        %v761 = vld [vmem:[%s183 + $0x10] sm:$0x4]
        %v762 = vsel %vm748, %v731, %v761
        %763 = vst [vmem:[%s183 + $0x10] sm:$0x4] %v762
        %v764 = vld [vmem:[%s183 + $0x14] sm:$0x4]
        %v765 = vsel %vm748, %v733, %v764
        %766 = vst [vmem:[%s183 + $0x14] sm:$0x4] %v765
        %v767 = vld [vmem:[%s183 + $0x18] sm:$0x4]
        %v768 = vsel %vm748, %v735, %v767
        %769 = vst [vmem:[%s183 + $0x18] sm:$0x4] %v768
        %v770 = vld [vmem:[%s183 + $0x1c] sm:$0x4]
        %v771 = vsel %vm748, %v737, %v770
        %772 = vst [vmem:[%s183 + $0x1c] sm:$0x4] %v771
        %773 = vrot.lane.b32.xlu0 %v486, 38
        %v774 = vpop.permute.xlu0 %773
        %775 = vrot.lane.b32.xlu0 %v493, 38
        %v776 = vpop.permute.xlu0 %775
        %777 = vrot.lane.b32.xlu0 %v500, 38
        %v778 = vpop.permute.xlu0 %777
        %779 = vrot.lane.b32.xlu0 %v507, 38
        %v780 = vpop.permute.xlu0 %779
        %781 = vrot.lane.b32.xlu0 %v514, 38
        %v782 = vpop.permute.xlu0 %781
        %783 = vrot.lane.b32.xlu0 %v521, 38
        %v784 = vpop.permute.xlu0 %783
        %785 = vrot.lane.b32.xlu0 %v528, 38
        %v786 = vpop.permute.xlu0 %785
        %787 = vrot.lane.b32.xlu0 %v535, 38
        %v788 = vpop.permute.xlu0 %787
        %vm797 = vsmask.f32 7946
        %vm798 = vmand %vm746, %vm797
        %v799 = vld [vmem:[%s183] sm:$0x4]
        %v800 = vsel %vm798, %v774, %v799
        %801 = vst [vmem:[%s183] sm:$0x4] %v800
        %v802 = vld [vmem:[%s183 + $0x4] sm:$0x4]
        %v803 = vsel %vm798, %v776, %v802
        %804 = vst [vmem:[%s183 + $0x4] sm:$0x4] %v803
        %v805 = vld [vmem:[%s183 + $0x8] sm:$0x4]
        %v806 = vsel %vm798, %v778, %v805
        %807 = vst [vmem:[%s183 + $0x8] sm:$0x4] %v806
        %v808 = vld [vmem:[%s183 + $0xc] sm:$0x4]
        %v809 = vsel %vm798, %v780, %v808
        %810 = vst [vmem:[%s183 + $0xc] sm:$0x4] %v809
        %v811 = vld [vmem:[%s183 + $0x10] sm:$0x4]
        %v812 = vsel %vm798, %v782, %v811
        %813 = vst [vmem:[%s183 + $0x10] sm:$0x4] %v812
        %v814 = vld [vmem:[%s183 + $0x14] sm:$0x4]
        %v815 = vsel %vm798, %v784, %v814
        %816 = vst [vmem:[%s183 + $0x14] sm:$0x4] %v815
        %v817 = vld [vmem:[%s183 + $0x18] sm:$0x4]
        %v818 = vsel %vm798, %v786, %v817
        %819 = vst [vmem:[%s183 + $0x18] sm:$0x4] %v818
        %v820 = vld [vmem:[%s183 + $0x1c] sm:$0x4]
        %v821 = vsel %vm798, %v788, %v820
        %822 = vst [vmem:[%s183 + $0x1c] sm:$0x4] %v821
        %823 = vrot.lane.b32.xlu0 %v486, 20
        %v824 = vpop.permute.xlu0 %823
        %825 = vrot.lane.b32.xlu0 %v493, 20
        %v826 = vpop.permute.xlu0 %825
        %827 = vrot.lane.b32.xlu0 %v500, 20
        %v828 = vpop.permute.xlu0 %827
        %829 = vrot.lane.b32.xlu0 %v507, 20
        %v830 = vpop.permute.xlu0 %829
        %831 = vrot.lane.b32.xlu0 %v514, 20
        %v832 = vpop.permute.xlu0 %831
        %833 = vrot.lane.b32.xlu0 %v521, 20
        %v834 = vpop.permute.xlu0 %833
        %835 = vrot.lane.b32.xlu0 %v528, 20
        %v836 = vpop.permute.xlu0 %835
        %837 = vrot.lane.b32.xlu0 %v535, 20
        %v838 = vpop.permute.xlu0 %837
        %vm847 = vcmask 125955
        %vm848 = vsmask.f32 3328
        %vm849 = vmand %vm847, %vm848
        %v850 = vld [vmem:[%s183] sm:$0x8]
        %v851 = vsel %vm849, %v824, %v850
        %852 = vst [vmem:[%s183] sm:$0x8] %v851
        %v853 = vld [vmem:[%s183 + $0x4] sm:$0x8]
        %v854 = vsel %vm849, %v826, %v853
        %855 = vst [vmem:[%s183 + $0x4] sm:$0x8] %v854
        %v856 = vld [vmem:[%s183 + $0x8] sm:$0x8]
        %v857 = vsel %vm849, %v828, %v856
        %858 = vst [vmem:[%s183 + $0x8] sm:$0x8] %v857
        %v859 = vld [vmem:[%s183 + $0xc] sm:$0x8]
        %v860 = vsel %vm849, %v830, %v859
        %861 = vst [vmem:[%s183 + $0xc] sm:$0x8] %v860
        %v862 = vld [vmem:[%s183 + $0x10] sm:$0x8]
        %v863 = vsel %vm849, %v832, %v862
        %864 = vst [vmem:[%s183 + $0x10] sm:$0x8] %v863
        %v865 = vld [vmem:[%s183 + $0x14] sm:$0x8]
        %v866 = vsel %vm849, %v834, %v865
        %867 = vst [vmem:[%s183 + $0x14] sm:$0x8] %v866
        %v868 = vld [vmem:[%s183 + $0x18] sm:$0x8]
        %v869 = vsel %vm849, %v836, %v868
        %870 = vst [vmem:[%s183 + $0x18] sm:$0x8] %v869
        %v871 = vld [vmem:[%s183 + $0x1c] sm:$0x8]
        %v872 = vsel %vm849, %v838, %v871
        %873 = vst [vmem:[%s183 + $0x1c] sm:$0x8] %v872
        %v875 = vcombine.low %v437, %v438
        %v877 = vunpack.c.l.s4 1966171168
        %v878 = vunpack.c.0.s8 %v877
        %v879 = vlaneseq
        %v880 = vshrl.u32 %v879, 7
        %v881 = vsub.s32 %v878, %v880
        %v882 = vrot.slane %v875, %v881
        %v883 = vcombine.high %v882, %v882
        %v885 = vunpack.c.l.s4 1966171168
        %v886 = vunpack.c.0.s8 %v885
        %v887 = vlaneseq
        %v888 = vshrl.u32 %v887, 7
        %v889 = vsub.s32 %v886, %v888
        %v890 = vrot.slane %v882, %v889
        %v892 = vunpack.c.l.s4 1966171168
        %v893 = vunpack.c.0.s8 %v892
        %v894 = vlaneseq
        %v895 = vshrl.u32 %v894, 7
        %v896 = vsub.s32 %v893, %v895
        %v897 = vrot.slane %v883, %v896
        %v898 = vcombine.high %v890, %v890
        %v899 = vcombine.high %v897, %v897
        %v900 = vunpack.i.l.s16 %v890
        %v901 = vunpack.i.h.s16 %v890
        %v902 = vunpack.i.l.s16 %v897
        %v903 = vunpack.i.h.s16 %v897
        %v904 = vunpack.i.l.s16 %v898
        %v905 = vunpack.i.h.s16 %v898
        %v906 = vunpack.i.l.s16 %v899
        %v907 = vunpack.i.h.s16 %v899
        %v908 = vpack.i.b16 %v900, %v900
        %v909 = vpack.i.b16 %v901, %v901
        %v910 = vpack.i.b16 %v902, %v902
        %v911 = vpack.i.b16 %v903, %v903
        %v912 = vpack.i.b16 %v904, %v904
        %v913 = vpack.i.b16 %v905, %v905
        %v914 = vpack.i.b16 %v906, %v906
        %v915 = vpack.i.b16 %v907, %v907
        %v917 = vunpack.c.l.s4 286326784
        %v918 = vunpack.c.0.s8 %v917
        %v919 = vlaneseq
        %v920 = vshrl.u32 %v919, 7
        %v921 = vsub.s32 %v918, %v920
        %v922 = vrot.slane %v908, %v921
        %v924 = vunpack.c.l.s4 286326784
        %v925 = vunpack.c.0.s8 %v924
        %v926 = vlaneseq
        %v927 = vshrl.u32 %v926, 7
        %v928 = vsub.s32 %v925, %v927
        %v929 = vrot.slane %v909, %v928
        %v931 = vunpack.c.l.s4 286326784
        %v932 = vunpack.c.0.s8 %v931
        %v933 = vlaneseq
        %v934 = vshrl.u32 %v933, 7
        %v935 = vsub.s32 %v932, %v934
        %v936 = vrot.slane %v910, %v935
        %v938 = vunpack.c.l.s4 286326784
        %v939 = vunpack.c.0.s8 %v938
        %v940 = vlaneseq
        %v941 = vshrl.u32 %v940, 7
        %v942 = vsub.s32 %v939, %v941
        %v943 = vrot.slane %v911, %v942
        %v945 = vunpack.c.l.s4 286326784
        %v946 = vunpack.c.0.s8 %v945
        %v947 = vlaneseq
        %v948 = vshrl.u32 %v947, 7
        %v949 = vsub.s32 %v946, %v948
        %v950 = vrot.slane %v912, %v949
        %v952 = vunpack.c.l.s4 286326784
        %v953 = vunpack.c.0.s8 %v952
        %v954 = vlaneseq
        %v955 = vshrl.u32 %v954, 7
        %v956 = vsub.s32 %v953, %v955
        %v957 = vrot.slane %v913, %v956
        %v959 = vunpack.c.l.s4 286326784
        %v960 = vunpack.c.0.s8 %v959
        %v961 = vlaneseq
        %v962 = vshrl.u32 %v961, 7
        %v963 = vsub.s32 %v960, %v962
        %v964 = vrot.slane %v914, %v963
        %v966 = vunpack.c.l.s4 286326784
        %v967 = vunpack.c.0.s8 %v966
        %v968 = vlaneseq
        %v969 = vshrl.u32 %v968, 7
        %v970 = vsub.s32 %v967, %v969
        %v971 = vrot.slane %v915, %v970
        %972 = vrot.lane.b32.xlu0 %v922, 2
        %v973 = vpop.permute.xlu0 %972
        %974 = vrot.lane.b32.xlu0 %v929, 2
        %v975 = vpop.permute.xlu0 %974
        %976 = vrot.lane.b32.xlu0 %v936, 2
        %v977 = vpop.permute.xlu0 %976
        %978 = vrot.lane.b32.xlu0 %v943, 2
        %v979 = vpop.permute.xlu0 %978
        %980 = vrot.lane.b32.xlu0 %v950, 2
        %v981 = vpop.permute.xlu0 %980
        %982 = vrot.lane.b32.xlu0 %v957, 2
        %v983 = vpop.permute.xlu0 %982
        %984 = vrot.lane.b32.xlu0 %v964, 2
        %v985 = vpop.permute.xlu0 %984
        %986 = vrot.lane.b32.xlu0 %v971, 2
        %v987 = vpop.permute.xlu0 %986
        %v988 = vrot.slane %v973, 4
        %v989 = vrot.slane %v975, 4
        %v990 = vrot.slane %v977, 4
        %v991 = vrot.slane %v979, 4
        %v992 = vrot.slane %v981, 4
        %v993 = vrot.slane %v983, 4
        %v994 = vrot.slane %v985, 4
        %v995 = vrot.slane %v987, 4
        %vm996 = vcmask 15360
        %v997 = vsel %vm996, %v973, %v988
        %v998 = vsel %vm996, %v975, %v989
        %v999 = vsel %vm996, %v977, %v990
        %v1000 = vsel %vm996, %v979, %v991
        %v1001 = vsel %vm996, %v981, %v992
        %v1002 = vsel %vm996, %v983, %v993
        %v1003 = vsel %vm996, %v985, %v994
        %v1004 = vsel %vm996, %v987, %v995
        %vm1013 = vsmask.f32 7950
        %vm1014 = vmand %vm847, %vm1013
        %v1015 = vld [vmem:[%s183] sm:$0x8]
        %v1016 = vsel %vm1014, %v997, %v1015
        %1017 = vst [vmem:[%s183] sm:$0x8] %v1016
        %v1018 = vld [vmem:[%s183 + $0x4] sm:$0x8]
        %v1019 = vsel %vm1014, %v998, %v1018
        %1020 = vst [vmem:[%s183 + $0x4] sm:$0x8] %v1019
        %v1021 = vld [vmem:[%s183 + $0x8] sm:$0x8]
        %v1022 = vsel %vm1014, %v999, %v1021
        %1023 = vst [vmem:[%s183 + $0x8] sm:$0x8] %v1022
        %v1024 = vld [vmem:[%s183 + $0xc] sm:$0x8]
        %v1025 = vsel %vm1014, %v1000, %v1024
        %1026 = vst [vmem:[%s183 + $0xc] sm:$0x8] %v1025
        %v1027 = vld [vmem:[%s183 + $0x10] sm:$0x8]
        %v1028 = vsel %vm1014, %v1001, %v1027
        %1029 = vst [vmem:[%s183 + $0x10] sm:$0x8] %v1028
        %v1030 = vld [vmem:[%s183 + $0x14] sm:$0x8]
        %v1031 = vsel %vm1014, %v1002, %v1030
        %1032 = vst [vmem:[%s183 + $0x14] sm:$0x8] %v1031
        %v1033 = vld [vmem:[%s183 + $0x18] sm:$0x8]
        %v1034 = vsel %vm1014, %v1003, %v1033
        %1035 = vst [vmem:[%s183 + $0x18] sm:$0x8] %v1034
        %v1036 = vld [vmem:[%s183 + $0x1c] sm:$0x8]
        %v1037 = vsel %vm1014, %v1004, %v1036
        %1038 = vst [vmem:[%s183 + $0x1c] sm:$0x8] %v1037
        %s1039 = sand.u32 %s106, 1
        %s1040 = sand.u32 %s106, 1
        %s1041 = smul.addr %s1040, 32
        %s1042 = scalar_lea.vmem [#allocation3], %s1041
        // Predicated region
        $region33: #{fwd.2} parent=31 // pred_check
          %p1043 = pneg %p116
        $region34: #{fwd.2} parent=31 // pred_check_branch
          %1045 = sbr.rel (%p1043) target = $region36
        $region35: #{fwd.2} parent=31 // pred_region
          %s1046 = smul.addr %s18, 16
          %s1047 = sadd.s32 %s19, %s1046
          %s1048 = smul.addr %s1047, 4
          %s1049 = scalar_lea.vmem %s3, %s1048
          // Predicated region
          $region37: #{fwd.2} parent=35 // pred_check
            _
          $region38: #{fwd.2} parent=35 // pred_check_branch
            %1051 = sbr.rel (0) target = $region40
          $region39: #{fwd.2} parent=35 // pred_region
            // Predicated region
            $region41: #{fwd.2} parent=39 // pred_check
              _
            $region42: #{fwd.2} parent=39 // pred_check_branch
              %1053 = sbr.rel target = $region44
            $region43: #{fwd.2} parent=39 // pred_region
              // Predicated region
              $region56: #{fwd.2} parent=43 // pred_check
                _
              $region57: #{fwd.2} parent=43 // pred_check_branch
                %1082 = sbr.rel (0) target = $region59
              $region58: #{fwd.2} parent=43 // pred_region
                loop: start=0, step=1, limit=1
                $region60: #{fwd.2} parent=58 // loop_pre_header
                  _
                $region61: #{fwd.2} parent=58 // loop_header
                  %s1084 = sphi 0, %s1088
                  %p1085 = scmp.ge.s32.totalorder %s1084, 1
                  %s1089 = sphi %s1042, %s1042
                  %s1090 = sphi %s1049, %s1049
                $region62: #{fwd.2} parent=58 // loop_header_branch
                  %1087 = sbr.rel (%p1085) target = $region66
                $region63: #{fwd.2} parent=58 // loop_body
                  _
                $region64: #{fwd.2} parent=58 // loop_footer
                  %s1088 = sadd.s32 1, %s1084
                $region65: #{fwd.2} parent=58 // loop_footer_branch
                  %1083 = sbr.rel target = $region61
                $region66: #{fwd.2} parent=58 // loop_exit
                  _
                loop: start=0, step=1, limit=1
                $region67: #{fwd.2} parent=58 // loop_pre_header
                  _
                $region68: #{fwd.2} parent=58 // loop_header
                  %s1093 = sphi 0, %s1097
                  %p1094 = scmp.ge.s32.totalorder %s1093, 1
                  %s1098 = sphi %s1042, %s1042
                  %s1099 = sphi %s1049, %s1049
                $region69: #{fwd.2} parent=58 // loop_header_branch
                  %1096 = sbr.rel (%p1094) target = $region73
                $region70: #{fwd.2} parent=58 // loop_body
                  %v1100 = vld [vmem:[%s1098] sm:$0xf]
                  %1101 = vst [vmem:[%s1099] sm:$0xf] %v1100
                  %v1102 = vld [vmem:[%s1098 + $0x4] sm:$0xf]
                  %1103 = vst [vmem:[%s1099 + $0x8] sm:$0xf] %v1102
                  %v1104 = vld [vmem:[%s1098 + $0x8] sm:$0xf]
                  %1105 = vst [vmem:[%s1099 + $0x10] sm:$0xf] %v1104
                  %v1106 = vld [vmem:[%s1098 + $0xc] sm:$0xf]
                  %1107 = vst [vmem:[%s1099 + $0x18] sm:$0xf] %v1106
                  %v1108 = vld [vmem:[%s1098 + $0x10] sm:$0xf]
                  %1109 = vst [vmem:[%s1099 + $0x20] sm:$0xf] %v1108
                  %v1110 = vld [vmem:[%s1098 + $0x14] sm:$0xf]
                  %1111 = vst [vmem:[%s1099 + $0x28] sm:$0xf] %v1110
                  %v1112 = vld [vmem:[%s1098 + $0x18] sm:$0xf]
                  %1113 = vst [vmem:[%s1099 + $0x30] sm:$0xf] %v1112
                  %v1114 = vld [vmem:[%s1098 + $0x1c] sm:$0xf]
                  %1115 = vst [vmem:[%s1099 + $0x38] sm:$0xf] %v1114
                $region71: #{fwd.2} parent=58 // loop_footer
                  %s1097 = sadd.s32 1, %s1093
                $region72: #{fwd.2} parent=58 // loop_footer_branch
                  %1092 = sbr.rel target = $region68
                $region73: #{fwd.2} parent=58 // loop_exit
                  _
              $region59: #{fwd.2} parent=43 // pred_fallthru
                _
            $region44: #{fwd.2} parent=39 // pred_fallthru
              _
            // Predicated region
            $region45: #{fwd.2} parent=39 // pred_check
              _
            $region46: #{fwd.2} parent=39 // pred_check_branch
              %1055 = sbr.rel (0) target = $region48
            $region47: #{fwd.2} parent=39 // pred_region
              loop: start=0, step=1, limit=1
              $region49: #{fwd.2} parent=47 // loop_pre_header
                _
              $region50: #{fwd.2} parent=47 // loop_header
                %s1058 = sphi 0, %s1062
                %p1059 = scmp.ge.s32.totalorder %s1058, 1
                %s1063 = sphi %s1042, %s1042
                %s1064 = sphi %s1049, %s1049
              $region51: #{fwd.2} parent=47 // loop_header_branch
                %1061 = sbr.rel (%p1059) target = $region55
              $region52: #{fwd.2} parent=47 // loop_body
                %v1065 = vld [vmem:[%s1063] sm:$0xf]
                %1066 = vst [vmem:[%s1064] sm:$0xf] %v1065
                %v1067 = vld [vmem:[%s1063 + $0x4] sm:$0xf]
                %1068 = vst [vmem:[%s1064 + $0x8] sm:$0xf] %v1067
                %v1069 = vld [vmem:[%s1063 + $0x8] sm:$0xf]
                %1070 = vst [vmem:[%s1064 + $0x10] sm:$0xf] %v1069
                %v1071 = vld [vmem:[%s1063 + $0xc] sm:$0xf]
                %1072 = vst [vmem:[%s1064 + $0x18] sm:$0xf] %v1071
                %v1073 = vld [vmem:[%s1063 + $0x10] sm:$0xf]
                %1074 = vst [vmem:[%s1064 + $0x20] sm:$0xf] %v1073
                %v1075 = vld [vmem:[%s1063 + $0x14] sm:$0xf]
                %1076 = vst [vmem:[%s1064 + $0x28] sm:$0xf] %v1075
                %v1077 = vld [vmem:[%s1063 + $0x18] sm:$0xf]
                %1078 = vst [vmem:[%s1064 + $0x30] sm:$0xf] %v1077
                %v1079 = vld [vmem:[%s1063 + $0x1c] sm:$0xf]
                %1080 = vst [vmem:[%s1064 + $0x38] sm:$0xf] %v1079
              $region53: #{fwd.2} parent=47 // loop_footer
                %s1062 = sadd.s32 1, %s1058
              $region54: #{fwd.2} parent=47 // loop_footer_branch
                %1057 = sbr.rel target = $region50
              $region55: #{fwd.2} parent=47 // loop_exit
                _
            $region48: #{fwd.2} parent=39 // pred_fallthru
              _
          $region40: #{fwd.2} parent=35 // pred_fallthru
            _
          %1116 = vnop
        $region36: #{fwd.2} parent=31 // pred_fallthru
          _
      $region32: #{fwd.2} parent=5 // pred_fallthru
        _
      %p1117 = scmp.le.s32.totalorder 2, %s9
      // Predicated region
      $region74: #{fwd.2} parent=5 // pred_check
        %p1118 = pneg %p1117
      $region75: #{fwd.2} parent=5 // pred_check_branch
        %1120 = sbr.rel (%p1118) target = $region77
      $region76: #{fwd.2} parent=5 // pred_region
        %s1121 = ssub.s32 %s9, 2
        // Predicated region
        $region78: #{fwd.2} parent=76 // pred_check
          %p1122 = pneg %p122
        $region79: #{fwd.2} parent=76 // pred_check_branch
          %1124 = sbr.rel (%p1122) target = $region81
        $region80: #{fwd.2} parent=76 // pred_region
          %s1125 = sand.u32 %s107, 1
          %s1126 = sand.u32 %s107, 1
          %s1127 = smul.addr %s1126, 32
          %s1128 = scalar_lea.vmem [#allocation3], %s1127
        $region81: #{fwd.2} parent=76 // pred_fallthru
          _
      $region77: #{fwd.2} parent=5 // pred_fallthru
        _
    $region6: #{fwd.2} parent=1 // loop_footer
      %s13 = sadd.s32 1, %s9
    $region7: #{fwd.2} parent=1 // loop_footer_branch
      %8 = sbr.rel target = $region3
    $region8: #{fwd.2} parent=1 // loop_exit
      _

</llo_original>
